<compile_context>
chip_gen: v7x
topology: tpu7x:2x2x1
jax: 0.10.0
libtpu: 0.0.40
codegen_flags: <defaults>
</compile_context>

<pallas_src>
import functools

import jax
import jax.numpy as jnp
import numpy as np
from jax.experimental import pallas as pl
from jax.experimental.pallas import tpu as pltpu


def _iconv_tap_kernel(pep_ref, mhc_ref, w_ref, b_ref, out_ref):
    """Stride-1 fast path: per-tap shifted-window conv, no im2col expansion.

    pep_ref : (B, L_pep, D)   raw peptide block
    mhc_ref : (B*D, L_mhc)    mhc_rows[b*D+d, l] = mhc[b, l, d]
    w_ref   : (K, L_mhc, O)   w_ref[j, l, o]     = weight[o, j, l]
    b_ref   : (1, O)          bias
    out_ref : (B, L_out, O)   output block
    """
    K, _, O = w_ref.shape
    B, L_out, _ = out_ref.shape
    D = pep_ref.shape[-1]

    mhc_rows = mhc_ref[...]                                       # (B*D, L_mhc)

    acc = jnp.zeros((B, L_out, O), jnp.float32)
    for j in range(K):                                            # static unroll, K small
        # Interaction kernel, tap j: tall non-batched MXU matmul (M = B*D).
        kj = jnp.dot(mhc_rows, w_ref[j],
                     preferred_element_type=jnp.float32)          # (B*D, O)
        kj = jnp.maximum(kj, 0.0).reshape(B, D, O)                # relu, per-sample
        kj = kj.astype(pep_ref.dtype)                             # no-op for f32
        # Shifted peptide window for tap j, straight from the VMEM tile.
        pep_j = pep_ref[:, pl.ds(j, L_out), :]                    # (B, L_out, D)
        acc = acc + jnp.einsum('btd,bdo->bto', pep_j, kj,
                               preferred_element_type=jnp.float32)
    out_ref[...] = (acc + b_ref[...][None]).astype(out_ref.dtype)


def _iconv_im2col_kernel(patches_ref, mhc_ref, w_ref, b_ref, out_ref):
    """General-stride fallback: wrapper builds im2col patches (B, L_out, K*D)."""
    K, _, O = w_ref.shape
    B, L_out, KD = patches_ref.shape
    D = KD // K

    mhc_rows = mhc_ref[...]                                       # (B*D, L_mhc)
    taps = []
    for j in range(K):
        kj = jnp.dot(mhc_rows, w_ref[j],
                     preferred_element_type=jnp.float32)          # (B*D, O)
        kj = jnp.maximum(kj, 0.0)
        taps.append(kj.reshape(B, 1, D, O))                       # lane dim unchanged
    kern_rhs = jnp.concatenate(taps, axis=1).reshape(B, K * D, O)  # (B, K*D, O)
    kern_rhs = kern_rhs.astype(patches_ref.dtype)

    out_blk = jnp.einsum('btc,bco->bto', patches_ref[...], kern_rhs,
                         preferred_element_type=jnp.float32)      # (B, L_out, O)
    out_ref[...] = (out_blk + b_ref[...][None]).astype(out_ref.dtype)


def iconv(peptide_x, mhc_x, weight, bias, *, stride=1, block_b=32,
          operand_dtype=None):
    """Pallas IConv forward.  Returns (bs, out_channels, L_out) like the PyTorch module.

    `block_b` samples are processed per grid step (clamped to bs); the default 32
    gives M = block_b*D = 1024 rows per interaction matmul and amortizes per-step
    pipeline overhead.  `operand_dtype=jnp.bfloat16` halves operand traffic on
    v6e/v7x (accumulation stays f32); default is f32.
    """
    bs, L_pep, D = peptide_x.shape
    _, L_mhc, _ = mhc_x.shape
    O, K, _ = weight.shape
    L_out = (L_pep - K) // stride + 1

    block_b = max(1, min(block_b, bs))
    bs_pad = pl.cdiv(bs, block_b) * block_b
    if bs_pad != bs:
        pad = bs_pad - bs
        peptide_x = jnp.pad(peptide_x, ((0, pad), (0, 0), (0, 0)))
        mhc_x = jnp.pad(mhc_x, ((0, pad), (0, 0), (0, 0)))

    if operand_dtype is not None:
        peptide_x = peptide_x.astype(operand_dtype)
        mhc_x = mhc_x.astype(operand_dtype)
        weight = weight.astype(operand_dtype)

    # --- layout plumbing done ONCE in XLA (not per grid step inside the kernel) ---
    # MHC rows: (bs_pad*D, L_mhc) with row b*D+d = mhc[b, :, d].
    mhc_rows = jnp.transpose(mhc_x, (0, 2, 1)).reshape(bs_pad * D, L_mhc)
    # Weight per-tap: (K, L_mhc, O) with w_taps[j, l, o] = weight[o, j, l].
    w_taps = jnp.transpose(weight, (1, 2, 0))
    bias2d = bias.reshape(1, O).astype(jnp.float32)

    grid = (bs_pad // block_b,)
    mhc_spec = pl.BlockSpec((block_b * D, L_mhc), lambda i: (i, 0))
    w_spec = pl.BlockSpec((K, L_mhc, O), lambda i: (0, 0, 0))
    b_spec = pl.BlockSpec((1, O), lambda i: (0, 0))
    out_spec = pl.BlockSpec((block_b, L_out, O), lambda i: (i, 0, 0))
    common = dict(
        out_shape=jax.ShapeDtypeStruct((bs_pad, L_out, O), jnp.float32),
        compiler_params=pltpu.CompilerParams(
            dimension_semantics=("parallel",)),
    )

    if stride == 1:
        # Fast path: read raw peptide (no im2col HBM expansion); K shifted
        # windows are sliced in-kernel from the resident VMEM tile.
        out = pl.pallas_call(
            _iconv_tap_kernel,
            grid_spec=pltpu.PrefetchScalarGridSpec(
                num_scalar_prefetch=0, grid=grid,
                in_specs=[
                    pl.BlockSpec((block_b, L_pep, D), lambda i: (i, 0, 0)),
                    mhc_spec, w_spec, b_spec,
                ],
                out_specs=out_spec),
            **common,
        )(peptide_x, mhc_rows, w_taps, bias2d)
    else:
        # TODO(synk): stride>1 path (unused by PE-DeepMHCII) keeps the wrapper-side
        # im2col expansion; it is not exercised in the self-test below.
        idx = jnp.arange(L_out)[:, None] * stride + jnp.arange(K)[None, :]
        patches = peptide_x[:, idx, :].reshape(bs_pad, L_out, K * D)
        out = pl.pallas_call(
            _iconv_im2col_kernel,
            grid_spec=pltpu.PrefetchScalarGridSpec(
                num_scalar_prefetch=0, grid=grid,
                in_specs=[
                    pl.BlockSpec((block_b, L_out, K * D), lambda i: (i, 0, 0)),
                    mhc_spec, w_spec, b_spec,
                ],
                out_specs=out_spec),
            **common,
        )(patches, mhc_rows, w_taps, bias2d)

    # (bs_pad, L_out, O) -> (bs, O, L_out): free wrapper-side layout plumbing.
    return jnp.transpose(out, (0, 2, 1))[:bs]


def iconv_ref(peptide_x, mhc_x, weight, bias, *, stride=1):
    """Pure-JAX reference matching the PyTorch forward."""
    hi = jax.lax.Precision.HIGHEST
    kern = jax.nn.relu(jnp.einsum('nld,okl->nodk', mhc_x, weight, precision=hi))
    bs, L_pep, D = peptide_x.shape
    O, K, _ = weight.shape
    L_out = (L_pep - K) // stride + 1
    idx = jnp.arange(L_out)[:, None] * stride + jnp.arange(K)[None, :]
    patches = peptide_x[:, idx, :]                                     # (bs,L_out,K,D)
    out = jnp.einsum('ntkd,nodk->not', patches, kern, precision=hi)
    return out + bias[None, :, None]


if __name__ == "__main__":
    key = jax.random.PRNGKey(0)
    k1, k2, k3, k4, k5, k6 = jax.random.split(key, 6)

    # Shapes consistent with the module: feature dim D=32, mhc_len=34 (default),
    # out_channels=16, kernel_size=9, stride=1.
    L_pep, D, L_mhc, O, K = 16, 32, 34, 16, 9
    # reset_parameters(): truncated_normal(std=0.02); bias is zero-init in the
    # module but we use a small nonzero bias here to exercise the bias path.
    weight = 0.02 * jax.random.truncated_normal(k3, -2.0, 2.0, (O, K, L_mhc),
                                                dtype=jnp.float32)
    bias = 0.1 * jax.random.normal(k6, (O,), jnp.float32)

    # Primary check: bs=2 (single grid step, block_b clamped to bs).
    bs = 2
    peptide_x = jax.random.normal(k1, (bs, L_pep, D), jnp.float32)
    mhc_x = jax.random.normal(k2, (bs, L_mhc, D), jnp.float32)
    out = iconv(peptide_x, mhc_x, weight, bias, stride=1)
    jax.block_until_ready(out)
    ref = iconv_ref(peptide_x, mhc_x, weight, bias, stride=1)
    np.testing.assert_allclose(np.asarray(out), np.asarray(ref),
                               rtol=1e-5, atol=1e-5)

    # Secondary check: bs=13 with block_b=8 -> exercises batch padding and a
    # 2-step grid (keeps both v7x TensorCores fed via "parallel" semantics).
    bs2 = 13
    peptide2 = jax.random.normal(k4, (bs2, L_pep, D), jnp.float32)
    mhc2 = jax.random.normal(k5, (bs2, L_mhc, D), jnp.float32)
    out2 = iconv(peptide2, mhc2, weight, bias, stride=1, block_b=8)
    jax.block_until_ready(out2)
    ref2 = iconv_ref(peptide2, mhc2, weight, bias, stride=1)
    np.testing.assert_allclose(np.asarray(out2), np.asarray(ref2),
                               rtol=1e-5, atol=1e-5)

    print("KERNEL_OK")
</pallas_src>

<mosaic_0001>
module attributes {stable_mosaic.version = 11 : i64} {
  func.func @_iconv_tap_kernel(%arg0: i32, %arg1: memref<2x16x32xf32, #tpu.memory_space<vmem>>, %arg2: memref<64x34xf32, #tpu.memory_space<vmem>>, %arg3: memref<9x34x16xf32, #tpu.memory_space<vmem>>, %arg4: memref<1x16xf32, #tpu.memory_space<vmem>>, %arg5: memref<2x8x16xf32, #tpu.memory_space<vmem>>) attributes {dimension_semantics = [#tpu.dimension_semantics<parallel>], iteration_bounds = array<i64: 1>, scalar_prefetch = 0 : i64, scratch_operands = 0 : i64, tpu.core_type = #tpu.core_type<tc>, window_params = [{transform_indices = @transform_0, window_bounds = array<i64: 2, 16, 32>}, {transform_indices = @transform_1, window_bounds = array<i64: 64, 34>}, {pipeline_mode = #tpu.pipeline_mode<synchronous>, transform_indices = @transform_2, window_bounds = array<i64: 9, 34, 16>}, {pipeline_mode = #tpu.pipeline_mode<synchronous>, transform_indices = @transform_3, window_bounds = array<i64: 1, 16>}, {transform_indices = @transform_4, window_bounds = array<i64: 2, 8, 16>}]} {
    %c0 = arith.constant 0 : index
    %c0_0 = arith.constant 0 : index
    %0 = vector.load %arg2[%c0, %c0_0] : memref<64x34xf32, #tpu.memory_space<vmem>>, vector<64x34xf32>
    %cst = arith.constant 0.000000e+00 : f32
    %1 = vector.broadcast %cst : f32 to vector<2x8x16xf32>
    %c0_1 = arith.constant 0 : index
    %c0_2 = arith.constant 0 : index
    %c0_3 = arith.constant 0 : index
    %2 = vector.load %arg3[%c0_1, %c0_2, %c0_3] : memref<9x34x16xf32, #tpu.memory_space<vmem>>, vector<1x34x16xf32>
    %3 = vector.shape_cast %2 : vector<1x34x16xf32> to vector<34x16xf32>
    %cst_4 = arith.constant dense<0.000000e+00> : vector<64x16xf32>
    %4 = tpu.matmul %0, %3, %cst_4 {dimension_numbers = #tpu.dot_dimension_numbers<[1], [0], [0], [1], [0, 0, 1, 1], [], []>} : vector<64x34xf32>, vector<34x16xf32>, vector<64x16xf32> -> vector<64x16xf32>
    %cst_5 = arith.constant 0.000000e+00 : f32
    %5 = vector.broadcast %cst_5 : f32 to vector<64x16xf32>
    %6 = arith.maximumf %4, %5 : vector<64x16xf32>
    %7 = vector.shape_cast %6 : vector<64x16xf32> to vector<2x32x16xf32>
    %c0_6 = arith.constant 0 : index
    %c0_7 = arith.constant 0 : index
    %c0_8 = arith.constant 0 : index
    %8 = vector.load %arg1[%c0_6, %c0_7, %c0_8] : memref<2x16x32xf32, #tpu.memory_space<vmem>>, vector<2x8x32xf32>
    "tpu.trace_start"() <{level = 10 : i32, message = "btd,bdo->bto"}> : () -> ()
    %cst_9 = arith.constant dense<0.000000e+00> : vector<2x8x16xf32>
    %9 = tpu.matmul %8, %7, %cst_9 {dimension_numbers = #tpu.dot_dimension_numbers<[2], [1], [1], [2], [0, 0, 0, 1, 1, 2], [0], [0]>} : vector<2x8x32xf32>, vector<2x32x16xf32>, vector<2x8x16xf32> -> vector<2x8x16xf32>
    "tpu.trace_stop"() : () -> ()
    %10 = arith.addf %1, %9 : vector<2x8x16xf32>
    %c1 = arith.constant 1 : index
    %c0_10 = arith.constant 0 : index
    %c0_11 = arith.constant 0 : index
    %11 = vector.load %arg3[%c1, %c0_10, %c0_11] : memref<9x34x16xf32, #tpu.memory_space<vmem>>, vector<1x34x16xf32>
    %12 = vector.shape_cast %11 : vector<1x34x16xf32> to vector<34x16xf32>
    %cst_12 = arith.constant dense<0.000000e+00> : vector<64x16xf32>
    %13 = tpu.matmul %0, %12, %cst_12 {dimension_numbers = #tpu.dot_dimension_numbers<[1], [0], [0], [1], [0, 0, 1, 1], [], []>} : vector<64x34xf32>, vector<34x16xf32>, vector<64x16xf32> -> vector<64x16xf32>
    %cst_13 = arith.constant 0.000000e+00 : f32
    %14 = vector.broadcast %cst_13 : f32 to vector<64x16xf32>
    %15 = arith.maximumf %13, %14 : vector<64x16xf32>
    %16 = vector.shape_cast %15 : vector<64x16xf32> to vector<2x32x16xf32>
    %c0_14 = arith.constant 0 : index
    %c1_15 = arith.constant 1 : index
    %c0_16 = arith.constant 0 : index
    %17 = vector.load %arg1[%c0_14, %c1_15, %c0_16] : memref<2x16x32xf32, #tpu.memory_space<vmem>>, vector<2x8x32xf32>
    "tpu.trace_start"() <{level = 10 : i32, message = "btd,bdo->bto"}> : () -> ()
    %cst_17 = arith.constant dense<0.000000e+00> : vector<2x8x16xf32>
    %18 = tpu.matmul %17, %16, %cst_17 {dimension_numbers = #tpu.dot_dimension_numbers<[2], [1], [1], [2], [0, 0, 0, 1, 1, 2], [0], [0]>} : vector<2x8x32xf32>, vector<2x32x16xf32>, vector<2x8x16xf32> -> vector<2x8x16xf32>
    "tpu.trace_stop"() : () -> ()
    %19 = arith.addf %10, %18 : vector<2x8x16xf32>
    %c2 = arith.constant 2 : index
    %c0_18 = arith.constant 0 : index
    %c0_19 = arith.constant 0 : index
    %20 = vector.load %arg3[%c2, %c0_18, %c0_19] : memref<9x34x16xf32, #tpu.memory_space<vmem>>, vector<1x34x16xf32>
    %21 = vector.shape_cast %20 : vector<1x34x16xf32> to vector<34x16xf32>
    %cst_20 = arith.constant dense<0.000000e+00> : vector<64x16xf32>
    %22 = tpu.matmul %0, %21, %cst_20 {dimension_numbers = #tpu.dot_dimension_numbers<[1], [0], [0], [1], [0, 0, 1, 1], [], []>} : vector<64x34xf32>, vector<34x16xf32>, vector<64x16xf32> -> vector<64x16xf32>
    %cst_21 = arith.constant 0.000000e+00 : f32
    %23 = vector.broadcast %cst_21 : f32 to vector<64x16xf32>
    %24 = arith.maximumf %22, %23 : vector<64x16xf32>
    %25 = vector.shape_cast %24 : vector<64x16xf32> to vector<2x32x16xf32>
    %c0_22 = arith.constant 0 : index
    %c2_23 = arith.constant 2 : index
    %c0_24 = arith.constant 0 : index
    %26 = vector.load %arg1[%c0_22, %c2_23, %c0_24] : memref<2x16x32xf32, #tpu.memory_space<vmem>>, vector<2x8x32xf32>
    "tpu.trace_start"() <{level = 10 : i32, message = "btd,bdo->bto"}> : () -> ()
    %cst_25 = arith.constant dense<0.000000e+00> : vector<2x8x16xf32>
    %27 = tpu.matmul %26, %25, %cst_25 {dimension_numbers = #tpu.dot_dimension_numbers<[2], [1], [1], [2], [0, 0, 0, 1, 1, 2], [0], [0]>} : vector<2x8x32xf32>, vector<2x32x16xf32>, vector<2x8x16xf32> -> vector<2x8x16xf32>
    "tpu.trace_stop"() : () -> ()
    %28 = arith.addf %19, %27 : vector<2x8x16xf32>
    %c3 = arith.constant 3 : index
    %c0_26 = arith.constant 0 : index
    %c0_27 = arith.constant 0 : index
    %29 = vector.load %arg3[%c3, %c0_26, %c0_27] : memref<9x34x16xf32, #tpu.memory_space<vmem>>, vector<1x34x16xf32>
    %30 = vector.shape_cast %29 : vector<1x34x16xf32> to vector<34x16xf32>
    %cst_28 = arith.constant dense<0.000000e+00> : vector<64x16xf32>
    %31 = tpu.matmul %0, %30, %cst_28 {dimension_numbers = #tpu.dot_dimension_numbers<[1], [0], [0], [1], [0, 0, 1, 1], [], []>} : vector<64x34xf32>, vector<34x16xf32>, vector<64x16xf32> -> vector<64x16xf32>
    %cst_29 = arith.constant 0.000000e+00 : f32
    %32 = vector.broadcast %cst_29 : f32 to vector<64x16xf32>
    %33 = arith.maximumf %31, %32 : vector<64x16xf32>
    %34 = vector.shape_cast %33 : vector<64x16xf32> to vector<2x32x16xf32>
    %c0_30 = arith.constant 0 : index
    %c3_31 = arith.constant 3 : index
    %c0_32 = arith.constant 0 : index
    %35 = vector.load %arg1[%c0_30, %c3_31, %c0_32] : memref<2x16x32xf32, #tpu.memory_space<vmem>>, vector<2x8x32xf32>
    "tpu.trace_start"() <{level = 10 : i32, message = "btd,bdo->bto"}> : () -> ()
    %cst_33 = arith.constant dense<0.000000e+00> : vector<2x8x16xf32>
    %36 = tpu.matmul %35, %34, %cst_33 {dimension_numbers = #tpu.dot_dimension_numbers<[2], [1], [1], [2], [0, 0, 0, 1, 1, 2], [0], [0]>} : vector<2x8x32xf32>, vector<2x32x16xf32>, vector<2x8x16xf32> -> vector<2x8x16xf32>
    "tpu.trace_stop"() : () -> ()
    %37 = arith.addf %28, %36 : vector<2x8x16xf32>
    %c4 = arith.constant 4 : index
    %c0_34 = arith.constant 0 : index
    %c0_35 = arith.constant 0 : index
    %38 = vector.load %arg3[%c4, %c0_34, %c0_35] : memref<9x34x16xf32, #tpu.memory_space<vmem>>, vector<1x34x16xf32>
    %39 = vector.shape_cast %38 : vector<1x34x16xf32> to vector<34x16xf32>
    %cst_36 = arith.constant dense<0.000000e+00> : vector<64x16xf32>
    %40 = tpu.matmul %0, %39, %cst_36 {dimension_numbers = #tpu.dot_dimension_numbers<[1], [0], [0], [1], [0, 0, 1, 1], [], []>} : vector<64x34xf32>, vector<34x16xf32>, vector<64x16xf32> -> vector<64x16xf32>
    %cst_37 = arith.constant 0.000000e+00 : f32
    %41 = vector.broadcast %cst_37 : f32 to vector<64x16xf32>
    %42 = arith.maximumf %40, %41 : vector<64x16xf32>
    %43 = vector.shape_cast %42 : vector<64x16xf32> to vector<2x32x16xf32>
    %c0_38 = arith.constant 0 : index
    %c4_39 = arith.constant 4 : index
    %c0_40 = arith.constant 0 : index
    %44 = vector.load %arg1[%c0_38, %c4_39, %c0_40] : memref<2x16x32xf32, #tpu.memory_space<vmem>>, vector<2x8x32xf32>
    "tpu.trace_start"() <{level = 10 : i32, message = "btd,bdo->bto"}> : () -> ()
    %cst_41 = arith.constant dense<0.000000e+00> : vector<2x8x16xf32>
    %45 = tpu.matmul %44, %43, %cst_41 {dimension_numbers = #tpu.dot_dimension_numbers<[2], [1], [1], [2], [0, 0, 0, 1, 1, 2], [0], [0]>} : vector<2x8x32xf32>, vector<2x32x16xf32>, vector<2x8x16xf32> -> vector<2x8x16xf32>
    "tpu.trace_stop"() : () -> ()
    %46 = arith.addf %37, %45 : vector<2x8x16xf32>
    %c5 = arith.constant 5 : index
    %c0_42 = arith.constant 0 : index
    %c0_43 = arith.constant 0 : index
    %47 = vector.load %arg3[%c5, %c0_42, %c0_43] : memref<9x34x16xf32, #tpu.memory_space<vmem>>, vector<1x34x16xf32>
    %48 = vector.shape_cast %47 : vector<1x34x16xf32> to vector<34x16xf32>
    %cst_44 = arith.constant dense<0.000000e+00> : vector<64x16xf32>
    %49 = tpu.matmul %0, %48, %cst_44 {dimension_numbers = #tpu.dot_dimension_numbers<[1], [0], [0], [1], [0, 0, 1, 1], [], []>} : vector<64x34xf32>, vector<34x16xf32>, vector<64x16xf32> -> vector<64x16xf32>
    %cst_45 = arith.constant 0.000000e+00 : f32
    %50 = vector.broadcast %cst_45 : f32 to vector<64x16xf32>
    %51 = arith.maximumf %49, %50 : vector<64x16xf32>
    %52 = vector.shape_cast %51 : vector<64x16xf32> to vector<2x32x16xf32>
    %c0_46 = arith.constant 0 : index
    %c5_47 = arith.constant 5 : index
    %c0_48 = arith.constant 0 : index
    %53 = vector.load %arg1[%c0_46, %c5_47, %c0_48] : memref<2x16x32xf32, #tpu.memory_space<vmem>>, vector<2x8x32xf32>
    "tpu.trace_start"() <{level = 10 : i32, message = "btd,bdo->bto"}> : () -> ()
    %cst_49 = arith.constant dense<0.000000e+00> : vector<2x8x16xf32>
    %54 = tpu.matmul %53, %52, %cst_49 {dimension_numbers = #tpu.dot_dimension_numbers<[2], [1], [1], [2], [0, 0, 0, 1, 1, 2], [0], [0]>} : vector<2x8x32xf32>, vector<2x32x16xf32>, vector<2x8x16xf32> -> vector<2x8x16xf32>
    "tpu.trace_stop"() : () -> ()
    %55 = arith.addf %46, %54 : vector<2x8x16xf32>
    %c6 = arith.constant 6 : index
    %c0_50 = arith.constant 0 : index
    %c0_51 = arith.constant 0 : index
    %56 = vector.load %arg3[%c6, %c0_50, %c0_51] : memref<9x34x16xf32, #tpu.memory_space<vmem>>, vector<1x34x16xf32>
    %57 = vector.shape_cast %56 : vector<1x34x16xf32> to vector<34x16xf32>
    %cst_52 = arith.constant dense<0.000000e+00> : vector<64x16xf32>
    %58 = tpu.matmul %0, %57, %cst_52 {dimension_numbers = #tpu.dot_dimension_numbers<[1], [0], [0], [1], [0, 0, 1, 1], [], []>} : vector<64x34xf32>, vector<34x16xf32>, vector<64x16xf32> -> vector<64x16xf32>
    %cst_53 = arith.constant 0.000000e+00 : f32
    %59 = vector.broadcast %cst_53 : f32 to vector<64x16xf32>
    %60 = arith.maximumf %58, %59 : vector<64x16xf32>
    %61 = vector.shape_cast %60 : vector<64x16xf32> to vector<2x32x16xf32>
    %c0_54 = arith.constant 0 : index
    %c6_55 = arith.constant 6 : index
    %c0_56 = arith.constant 0 : index
    %62 = vector.load %arg1[%c0_54, %c6_55, %c0_56] : memref<2x16x32xf32, #tpu.memory_space<vmem>>, vector<2x8x32xf32>
    "tpu.trace_start"() <{level = 10 : i32, message = "btd,bdo->bto"}> : () -> ()
    %cst_57 = arith.constant dense<0.000000e+00> : vector<2x8x16xf32>
    %63 = tpu.matmul %62, %61, %cst_57 {dimension_numbers = #tpu.dot_dimension_numbers<[2], [1], [1], [2], [0, 0, 0, 1, 1, 2], [0], [0]>} : vector<2x8x32xf32>, vector<2x32x16xf32>, vector<2x8x16xf32> -> vector<2x8x16xf32>
    "tpu.trace_stop"() : () -> ()
    %64 = arith.addf %55, %63 : vector<2x8x16xf32>
    %c7 = arith.constant 7 : index
    %c0_58 = arith.constant 0 : index
    %c0_59 = arith.constant 0 : index
    %65 = vector.load %arg3[%c7, %c0_58, %c0_59] : memref<9x34x16xf32, #tpu.memory_space<vmem>>, vector<1x34x16xf32>
    %66 = vector.shape_cast %65 : vector<1x34x16xf32> to vector<34x16xf32>
    %cst_60 = arith.constant dense<0.000000e+00> : vector<64x16xf32>
    %67 = tpu.matmul %0, %66, %cst_60 {dimension_numbers = #tpu.dot_dimension_numbers<[1], [0], [0], [1], [0, 0, 1, 1], [], []>} : vector<64x34xf32>, vector<34x16xf32>, vector<64x16xf32> -> vector<64x16xf32>
    %cst_61 = arith.constant 0.000000e+00 : f32
    %68 = vector.broadcast %cst_61 : f32 to vector<64x16xf32>
    %69 = arith.maximumf %67, %68 : vector<64x16xf32>
    %70 = vector.shape_cast %69 : vector<64x16xf32> to vector<2x32x16xf32>
    %c0_62 = arith.constant 0 : index
    %c7_63 = arith.constant 7 : index
    %c0_64 = arith.constant 0 : index
    %71 = vector.load %arg1[%c0_62, %c7_63, %c0_64] : memref<2x16x32xf32, #tpu.memory_space<vmem>>, vector<2x8x32xf32>
    "tpu.trace_start"() <{level = 10 : i32, message = "btd,bdo->bto"}> : () -> ()
    %cst_65 = arith.constant dense<0.000000e+00> : vector<2x8x16xf32>
    %72 = tpu.matmul %71, %70, %cst_65 {dimension_numbers = #tpu.dot_dimension_numbers<[2], [1], [1], [2], [0, 0, 0, 1, 1, 2], [0], [0]>} : vector<2x8x32xf32>, vector<2x32x16xf32>, vector<2x8x16xf32> -> vector<2x8x16xf32>
    "tpu.trace_stop"() : () -> ()
    %73 = arith.addf %64, %72 : vector<2x8x16xf32>
    %c8 = arith.constant 8 : index
    %c0_66 = arith.constant 0 : index
    %c0_67 = arith.constant 0 : index
    %74 = vector.load %arg3[%c8, %c0_66, %c0_67] : memref<9x34x16xf32, #tpu.memory_space<vmem>>, vector<1x34x16xf32>
    %75 = vector.shape_cast %74 : vector<1x34x16xf32> to vector<34x16xf32>
    %cst_68 = arith.constant dense<0.000000e+00> : vector<64x16xf32>
    %76 = tpu.matmul %0, %75, %cst_68 {dimension_numbers = #tpu.dot_dimension_numbers<[1], [0], [0], [1], [0, 0, 1, 1], [], []>} : vector<64x34xf32>, vector<34x16xf32>, vector<64x16xf32> -> vector<64x16xf32>
    %cst_69 = arith.constant 0.000000e+00 : f32
    %77 = vector.broadcast %cst_69 : f32 to vector<64x16xf32>
    %78 = arith.maximumf %76, %77 : vector<64x16xf32>
    %79 = vector.shape_cast %78 : vector<64x16xf32> to vector<2x32x16xf32>
    %c0_70 = arith.constant 0 : index
    %c8_71 = arith.constant 8 : index
    %c0_72 = arith.constant 0 : index
    %80 = vector.load %arg1[%c0_70, %c8_71, %c0_72] : memref<2x16x32xf32, #tpu.memory_space<vmem>>, vector<2x8x32xf32>
    "tpu.trace_start"() <{level = 10 : i32, message = "btd,bdo->bto"}> : () -> ()
    %cst_73 = arith.constant dense<0.000000e+00> : vector<2x8x16xf32>
    %81 = tpu.matmul %80, %79, %cst_73 {dimension_numbers = #tpu.dot_dimension_numbers<[2], [1], [1], [2], [0, 0, 0, 1, 1, 2], [0], [0]>} : vector<2x8x32xf32>, vector<2x32x16xf32>, vector<2x8x16xf32> -> vector<2x8x16xf32>
    "tpu.trace_stop"() : () -> ()
    %82 = arith.addf %73, %81 : vector<2x8x16xf32>
    %c0_74 = arith.constant 0 : index
    %c0_75 = arith.constant 0 : index
    %83 = vector.load %arg4[%c0_74, %c0_75] : memref<1x16xf32, #tpu.memory_space<vmem>>, vector<1x16xf32>
    %84 = vector.shape_cast %83 : vector<1x16xf32> to vector<1x1x16xf32>
    %85 = vector.broadcast %84 : vector<1x1x16xf32> to vector<2x8x16xf32>
    %86 = arith.addf %82, %85 : vector<2x8x16xf32>
    %c0_76 = arith.constant 0 : index
    %c0_77 = arith.constant 0 : index
    %c0_78 = arith.constant 0 : index
    %87 = vector.load %arg5[%c0_76, %c0_77, %c0_78] : memref<2x8x16xf32, #tpu.memory_space<vmem>>, vector<2x8x16xf32>
    tpu.vector_store %arg5[%c0_76, %c0_77, %c0_78], %86 {strides = array<i32>} : memref<2x8x16xf32, #tpu.memory_space<vmem>>, vector<2x8x16xf32>,
    return
  }
  func.func @transform_0(%arg0: i32) -> (i32, i32, i32) {
    %c0_i32 = arith.constant 0 : i32
    %c0_i32_0 = arith.constant 0 : i32
    %c0_i32_1 = arith.constant 0 : i32
    return %arg0, %c0_i32, %c0_i32_0 : i32, i32, i32
  }
  func.func @transform_1(%arg0: i32) -> (i32, i32) {
    %c0_i32 = arith.constant 0 : i32
    %c0_i32_0 = arith.constant 0 : i32
    return %arg0, %c0_i32 : i32, i32
  }
  func.func @transform_2(%arg0: i32) -> (i32, i32, i32) {
    %c0_i32 = arith.constant 0 : i32
    %c0_i32_0 = arith.constant 0 : i32
    %c0_i32_1 = arith.constant 0 : i32
    %c0_i32_2 = arith.constant 0 : i32
    return %c0_i32, %c0_i32_0, %c0_i32_1 : i32, i32, i32
  }
  func.func @transform_3(%arg0: i32) -> (i32, i32) {
    %c0_i32 = arith.constant 0 : i32
    %c0_i32_0 = arith.constant 0 : i32
    %c0_i32_1 = arith.constant 0 : i32
    return %c0_i32, %c0_i32_0 : i32, i32
  }
  func.func @transform_4(%arg0: i32) -> (i32, i32, i32) {
    %c0_i32 = arith.constant 0 : i32
    %c0_i32_0 = arith.constant 0 : i32
    %c0_i32_1 = arith.constant 0 : i32
    return %arg0, %c0_i32, %c0_i32_0 : i32, i32, i32
  }
}

</mosaic_0001>

<llo_original>
// kernel: tpu_custom_call.1
$region0: #{tpu_custom_call.1}
  #allocation0 [shape = 'u32[]', space=smem, size = 0x4, offset = 0x4, fixed_abs, tag = 'smem constant byte address 0x4 - core index']
  #allocation1 [shape = 'u32[144,128]{1,0:T(1,128)}', space=vmem, size = 0x12000, scoped, tag = 'internal scratch']
  %s0 = inlined_call_operand.vmem [shape: f32[2,16,32], index: 0, kind: input, shape index: {}]
  %s1 = inlined_call_operand.vmem [shape: f32[64,34], index: 1, kind: input, shape index: {}]
  %s2 = inlined_call_operand.vmem [shape: f32[9,34,16], index: 2, kind: input, shape index: {}]
  %s3 = inlined_call_operand.vmem [shape: f32[1,16], index: 3, kind: input, shape index: {}]
  %s4 = inlined_call_operand.hbm [shape: f32[2,8,16], index: 4, kind: output, shape index: {}]
  %s5 = sld [smem:[#allocation0]]
  $region26: #{tpu_custom_call.1} parent=0
    _
  %s7 = ssub.s32 1, %s5
  %s8 = scalar_select 0, %s7, %s5
  $region1: #{tpu_custom_call.1} parent=0
    #allocation2 [shape = 'u8[8192]{0}', space=vmem, size = 0x2000, scoped, tag = 'output window, operand 0, single buffered']
    #allocation3 [shape = 's32[1]{0}', space=sflag, size = 0x4, scoped, tag = 'scoped memory for tpu_custom_call.1']
    %9 = vsyncpa [#allocation3], 0
    // Predicated region
    $region2: #{tpu_custom_call.1} parent=1 // pred_check
      _
    $region3: #{tpu_custom_call.1} parent=1 // pred_check_branch
      %11 = sbr.rel (0) target = $region5
    $region4: #{tpu_custom_call.1} parent=1 // pred_region
      _
    $region5: #{tpu_custom_call.1} parent=1 // pred_fallthru
      _
    // Predicated region
    $region6: #{tpu_custom_call.1} parent=1 // pred_check
      _
    $region7: #{tpu_custom_call.1} parent=1 // pred_check_branch
      %13 = sbr.rel (0) target = $region9
    $region8: #{tpu_custom_call.1} parent=1 // pred_region
      _
    $region9: #{tpu_custom_call.1} parent=1 // pred_fallthru
      _
    // Predicated region
    $region10: #{tpu_custom_call.1} parent=1 // pred_check
      _
    $region11: #{tpu_custom_call.1} parent=1 // pred_check_branch
      %15 = sbr.rel (0) target = $region13
    $region12: #{tpu_custom_call.1} parent=1 // pred_region
      _
    $region13: #{tpu_custom_call.1} parent=1 // pred_fallthru
      _
    // Predicated region
    $region14: #{tpu_custom_call.1} parent=1 // pred_check
      _
    $region15: #{tpu_custom_call.1} parent=1 // pred_check_branch
      %17 = sbr.rel (0) target = $region17
    $region16: #{tpu_custom_call.1} parent=1 // pred_region
      _
    $region17: #{tpu_custom_call.1} parent=1 // pred_fallthru
      _
    %v18 = vld [vmem:[%s1] sm:$0xff]
    %v19 = vld [vmem:[%s1 + $0x8] sm:$0xff]
    %v20 = vld [vmem:[%s1 + $0x10] sm:$0xff]
    %v21 = vld [vmem:[%s1 + $0x18] sm:$0xff]
    %v22 = vld [vmem:[%s1 + $0x20] sm:$0xff]
    %v23 = vld [vmem:[%s1 + $0x28] sm:$0xff]
    %v24 = vld [vmem:[%s1 + $0x30] sm:$0xff]
    %v25 = vld [vmem:[%s1 + $0x38] sm:$0xff]
    %v26 = vld [vmem:[%s2] sm:$0xff]
    %v27 = vld [vmem:[%s2 + $0x8] sm:$0xff]
    %v28 = vld [vmem:[%s2 + $0x10] sm:$0xff]
    %v29 = vld [vmem:[%s2 + $0x18] sm:$0xff]
    %v30 = vld [vmem:[%s2 + $0x20] sm:$0x3]
    %vm31 = vcmask 277504
    %v33 = vsel %vm31, %v18, 0
    %v36 = vsel %vm31, %v19, 0
    %v39 = vsel %vm31, %v20, 0
    %v42 = vsel %vm31, %v21, 0
    %v45 = vsel %vm31, %v22, 0
    %v48 = vsel %vm31, %v23, 0
    %v51 = vsel %vm31, %v24, 0
    %v54 = vsel %vm31, %v25, 0
    %vm56 = vcmask 1041408
    %v58 = vsel %vm56, %v30, 0
    %60 = vmatprep.subr.mxu0 0.0
    %61 = vmatpush1.msra.mxu0 %v26
    %62 = vmatprep.subr.mxu0 0.0
    %63 = vmatpush1.msra.mxu0 %v27
    %64 = vmatprep.subr.mxu0 0.0
    %65 = vmatpush1.msra.mxu0 %v28
    %66 = vmatprep.subr.mxu0 0.0
    %67 = vmatpush1.msra.mxu0 %v29
    %68 = vmatprep.subr.mxu0 0.0
    %69 = vmatpush1.msra.mxu0 %v58
    %70 = vmatprep.subr.mxu0 0.0
    %71 = vmatpush1.msra.mxu0 0.0
    %72 = vmatprep.subr.mxu0 0.0
    %73 = vmatpush1.msra.mxu0 0.0
    %74 = vmatprep.subr.mxu0 0.0
    %75 = vmatpush1.msra.mxu0 0.0
    %76 = vmatprep.subr.mxu0 0.0
    %77 = vmatpush1.msra.mxu0 0.0
    %78 = vmatprep.subr.mxu0 0.0
    %79 = vmatpush1.msra.mxu0 0.0
    %80 = vmatprep.subr.mxu0 0.0
    %81 = vmatpush1.msra.mxu0 0.0
    %82 = vmatprep.subr.mxu0 0.0
    %83 = vmatpush1.msra.mxu0 0.0
    %84 = vmatprep.subr.mxu0 0.0
    %85 = vmatpush1.msra.mxu0 0.0
    %86 = vmatprep.subr.mxu0 0.0
    %87 = vmatpush1.msra.mxu0 0.0
    %88 = vmatprep.subr.mxu0 0.0
    %89 = vmatpush1.msra.mxu0 0.0
    %90 = vmatprep.subr.mxu0 0.0
    %91 = vmatpush1.msra.mxu0 0.0
    %92 = vmatprep.subr.mxu0 0.0
    %93 = vmatpush1.msra.mxu0 0.0
    %94 = vmatprep.subr.mxu0 0.0
    %95 = vmatpush1.msra.mxu0 0.0
    %96 = vmatprep.subr.mxu0 0.0
    %97 = vmatpush1.msra.mxu0 0.0
    %98 = vmatprep.subr.mxu0 0.0
    %99 = vmatpush1.msra.mxu0 0.0
    %100 = vmatprep.subr.mxu0 0.0
    %101 = vmatpush1.msra.mxu0 0.0
    %102 = vmatprep.subr.mxu0 0.0
    %103 = vmatpush1.msra.mxu0 0.0
    %104 = vmatprep.subr.mxu0 0.0
    %105 = vmatpush1.msra.mxu0 0.0
    %106 = vmatprep.subr.mxu0 0.0
    %107 = vmatpush1.msra.mxu0 0.0
    %108 = vmatprep.subr.mxu0 0.0
    %109 = vmatpush1.msra.mxu0 0.0
    %110 = vmatprep.subr.mxu0 0.0
    %111 = vmatpush1.msra.mxu0 0.0
    %112 = vmatprep.subr.mxu0 0.0
    %113 = vmatpush1.msra.mxu0 0.0
    %114 = vmatprep.subr.mxu0 0.0
    %115 = vmatpush1.msra.mxu0 0.0
    %116 = vmatprep.subr.mxu0 0.0
    %117 = vmatpush1.msra.mxu0 0.0
    %118 = vmatprep.subr.mxu0 0.0
    %119 = vmatpush1.msra.mxu0 0.0
    %120 = vmatprep.subr.mxu0 0.0
    %121 = vmatpush1.msra.mxu0 0.0
    %122 = vmatprep.subr.mxu0 0.0
    %123 = vmatpush1.msra.mxu0 0.0
    %124 = vmatprep.mubr.f32.mxu0 0.0
    %125 = vmatmul.mubr.f32.gmra.mrb[0].mxu0 %v33
    %v126 = vpop.f32.mrb[0].mxu0
    %v127 = vadd.f32 0.0, %v126
    %v128 = vpop.f32.mrb[0].mxu0
    %129 = vmatprep.mubr.f32.mxu0 0.0
    %130 = vmatmul.mubr.f32.gmra.mrb[0].mxu0 %v36
    %v131 = vpop.f32.mrb[0].mxu0
    %v132 = vadd.f32 0.0, %v131
    %v133 = vpop.f32.mrb[0].mxu0
    %134 = vmatprep.mubr.f32.mxu0 0.0
    %135 = vmatmul.mubr.f32.gmra.mrb[0].mxu0 %v39
    %v136 = vpop.f32.mrb[0].mxu0
    %v137 = vadd.f32 0.0, %v136
    %v138 = vpop.f32.mrb[0].mxu0
    %139 = vmatprep.mubr.f32.mxu0 0.0
    %140 = vmatmul.mubr.f32.gmra.mrb[0].mxu0 %v42
    %v141 = vpop.f32.mrb[0].mxu0
    %v142 = vadd.f32 0.0, %v141
    %v143 = vpop.f32.mrb[0].mxu0
    %144 = vmatprep.mubr.f32.mxu0 0.0
    %145 = vmatmul.mubr.f32.gmra.mrb[0].mxu0 %v45
    %v146 = vpop.f32.mrb[0].mxu0
    %v147 = vadd.f32 0.0, %v146
    %v148 = vpop.f32.mrb[0].mxu0
    %149 = vmatprep.mubr.f32.mxu0 0.0
    %150 = vmatmul.mubr.f32.gmra.mrb[0].mxu0 %v48
    %v151 = vpop.f32.mrb[0].mxu0
    %v152 = vadd.f32 0.0, %v151
    %v153 = vpop.f32.mrb[0].mxu0
    %154 = vmatprep.mubr.f32.mxu0 0.0
    %155 = vmatmul.mubr.f32.gmra.mrb[0].mxu0 %v51
    %v156 = vpop.f32.mrb[0].mxu0
    %v157 = vadd.f32 0.0, %v156
    %v158 = vpop.f32.mrb[0].mxu0
    %159 = vmatprep.mubr.f32.mxu0 0.0
    %160 = vmatmul.mubr.f32.gmra.mrb[0].mxu0 %v54
    %v161 = vpop.f32.mrb[0].mxu0
    %v162 = vadd.f32 0.0, %v161
    %v163 = vpop.f32.mrb[0].mxu0
    %164 = vdwg.mxu0
    %v165 = vmax.f32 %v127, 0.0
    %v166 = vmax.f32 %v132, 0.0
    %v167 = vmax.f32 %v137, 0.0
    %v168 = vmax.f32 %v142, 0.0
    %v169 = vmax.f32 %v147, 0.0
    %v170 = vmax.f32 %v152, 0.0
    %v171 = vmax.f32 %v157, 0.0
    %v172 = vmax.f32 %v162, 0.0
    %v173 = vld [vmem:[%s0] sm:$0xff]
    %v174 = vld [vmem:[%s0 + $0x10] sm:$0xff]
    %s175 = scalar_lea.vmem %s2, 40
    %v176 = vld [vmem:[%s175] sm:$0xff]
    %v177 = vld [vmem:[%s175 + $0x8] sm:$0xff]
    %v178 = vld [vmem:[%s175 + $0x10] sm:$0xff]
    %v179 = vld [vmem:[%s175 + $0x18] sm:$0xff]
    %v180 = vld [vmem:[%s175 + $0x20] sm:$0x3]
    %v182 = vsel %vm56, %v180, 0
    %184 = vmatprep.subr.mxu0 0.0
    %185 = vmatpush1.msra.mxu0 %v176
    %186 = vmatprep.subr.mxu0 0.0
    %187 = vmatpush1.msra.mxu0 %v177
    %188 = vmatprep.subr.mxu0 0.0
    %189 = vmatpush1.msra.mxu0 %v178
    %190 = vmatprep.subr.mxu0 0.0
    %191 = vmatpush1.msra.mxu0 %v179
    %192 = vmatprep.subr.mxu0 0.0
    %193 = vmatpush1.msra.mxu0 %v182
    %194 = vmatprep.subr.mxu0 0.0
    %195 = vmatpush1.msra.mxu0 0.0
    %196 = vmatprep.subr.mxu0 0.0
    %197 = vmatpush1.msra.mxu0 0.0
    %198 = vmatprep.subr.mxu0 0.0
    %199 = vmatpush1.msra.mxu0 0.0
    %200 = vmatprep.subr.mxu0 0.0
    %201 = vmatpush1.msra.mxu0 0.0
    %202 = vmatprep.subr.mxu0 0.0
    %203 = vmatpush1.msra.mxu0 0.0
    %204 = vmatprep.subr.mxu0 0.0
    %205 = vmatpush1.msra.mxu0 0.0
    %206 = vmatprep.subr.mxu0 0.0
    %207 = vmatpush1.msra.mxu0 0.0
    %208 = vmatprep.subr.mxu0 0.0
    %209 = vmatpush1.msra.mxu0 0.0
    %210 = vmatprep.subr.mxu0 0.0
    %211 = vmatpush1.msra.mxu0 0.0
    %212 = vmatprep.subr.mxu0 0.0
    %213 = vmatpush1.msra.mxu0 0.0
    %214 = vmatprep.subr.mxu0 0.0
    %215 = vmatpush1.msra.mxu0 0.0
    %216 = vmatprep.subr.mxu0 0.0
    %217 = vmatpush1.msra.mxu0 0.0
    %218 = vmatprep.subr.mxu0 0.0
    %219 = vmatpush1.msra.mxu0 0.0
    %220 = vmatprep.subr.mxu0 0.0
    %221 = vmatpush1.msra.mxu0 0.0
    %222 = vmatprep.subr.mxu0 0.0
    %223 = vmatpush1.msra.mxu0 0.0
    %224 = vmatprep.subr.mxu0 0.0
    %225 = vmatpush1.msra.mxu0 0.0
    %226 = vmatprep.subr.mxu0 0.0
    %227 = vmatpush1.msra.mxu0 0.0
    %228 = vmatprep.subr.mxu0 0.0
    %229 = vmatpush1.msra.mxu0 0.0
    %230 = vmatprep.subr.mxu0 0.0
    %231 = vmatpush1.msra.mxu0 0.0
    %232 = vmatprep.subr.mxu0 0.0
    %233 = vmatpush1.msra.mxu0 0.0
    %234 = vmatprep.subr.mxu0 0.0
    %235 = vmatpush1.msra.mxu0 0.0
    %236 = vmatprep.subr.mxu0 0.0
    %237 = vmatpush1.msra.mxu0 0.0
    %238 = vmatprep.subr.mxu0 0.0
    %239 = vmatpush1.msra.mxu0 0.0
    %240 = vmatprep.subr.mxu0 0.0
    %241 = vmatpush1.msra.mxu0 0.0
    %242 = vmatprep.subr.mxu0 0.0
    %243 = vmatpush1.msra.mxu0 0.0
    %244 = vmatprep.subr.mxu0 0.0
    %245 = vmatpush1.msra.mxu0 0.0
    %246 = vmatprep.subr.mxu0 0.0
    %247 = vmatpush1.msra.mxu0 0.0
    %248 = vmatprep.mubr.f32.mxu0 0.0
    %249 = vmatmul.mubr.f32.gmra.mrb[0].mxu0 %v33
    %v250 = vpop.f32.mrb[0].mxu0
    %v251 = vadd.f32 0.0, %v250
    %v252 = vpop.f32.mrb[0].mxu0
    %253 = vmatprep.mubr.f32.mxu0 0.0
    %254 = vmatmul.mubr.f32.gmra.mrb[0].mxu0 %v36
    %v255 = vpop.f32.mrb[0].mxu0
    %v256 = vadd.f32 0.0, %v255
    %v257 = vpop.f32.mrb[0].mxu0
    %258 = vmatprep.mubr.f32.mxu0 0.0
    %259 = vmatmul.mubr.f32.gmra.mrb[0].mxu0 %v39
    %v260 = vpop.f32.mrb[0].mxu0
    %v261 = vadd.f32 0.0, %v260
    %v262 = vpop.f32.mrb[0].mxu0
    %263 = vmatprep.mubr.f32.mxu0 0.0
    %264 = vmatmul.mubr.f32.gmra.mrb[0].mxu0 %v42
    %v265 = vpop.f32.mrb[0].mxu0
    %v266 = vadd.f32 0.0, %v265
    %v267 = vpop.f32.mrb[0].mxu0
    %268 = vmatprep.mubr.f32.mxu0 0.0
    %269 = vmatmul.mubr.f32.gmra.mrb[0].mxu0 %v45
    %v270 = vpop.f32.mrb[0].mxu0
    %v271 = vadd.f32 0.0, %v270
    %v272 = vpop.f32.mrb[0].mxu0
    %273 = vmatprep.mubr.f32.mxu0 0.0
    %274 = vmatmul.mubr.f32.gmra.mrb[0].mxu0 %v48
    %v275 = vpop.f32.mrb[0].mxu0
    %v276 = vadd.f32 0.0, %v275
    %v277 = vpop.f32.mrb[0].mxu0
    %278 = vmatprep.mubr.f32.mxu0 0.0
    %279 = vmatmul.mubr.f32.gmra.mrb[0].mxu0 %v51
    %v280 = vpop.f32.mrb[0].mxu0
    %v281 = vadd.f32 0.0, %v280
    %v282 = vpop.f32.mrb[0].mxu0
    %283 = vmatprep.mubr.f32.mxu0 0.0
    %284 = vmatmul.mubr.f32.gmra.mrb[0].mxu0 %v54
    %v285 = vpop.f32.mrb[0].mxu0
    %v286 = vadd.f32 0.0, %v285
    %v287 = vpop.f32.mrb[0].mxu0
    %288 = vdwg.mxu0
    %v289 = vmax.f32 %v251, 0.0
    %v290 = vmax.f32 %v256, 0.0
    %v291 = vmax.f32 %v261, 0.0
    %v292 = vmax.f32 %v266, 0.0
    %v293 = vmax.f32 %v271, 0.0
    %v294 = vmax.f32 %v276, 0.0
    %v295 = vmax.f32 %v281, 0.0
    %v296 = vmax.f32 %v286, 0.0
    %v297 = vld [vmem:[%s0 + $0x1] sm:$0xff]
    %v298 = vld [vmem:[%s0 + $0x11] sm:$0xff]
    %vm299 = vcmask 261120
    %v301 = vsel %vm299, %v297, 0
    %303 = vmatprep.subr.mxu0 0.0
    %304 = vmatpush1.msra.mxu0 %v289
    %305 = vmatprep.subr.mxu0 0.0
    %306 = vmatpush1.msra.mxu0 %v290
    %307 = vmatprep.subr.mxu0 0.0
    %308 = vmatpush1.msra.mxu0 %v291
    %309 = vmatprep.subr.mxu0 0.0
    %310 = vmatpush1.msra.mxu0 %v292
    %311 = vmatprep.subr.mxu0 0.0
    %312 = vmatpush1.msra.mxu0 0.0
    %313 = vmatprep.subr.mxu0 0.0
    %314 = vmatpush1.msra.mxu0 0.0
    %315 = vmatprep.subr.mxu0 0.0
    %316 = vmatpush1.msra.mxu0 0.0
    %317 = vmatprep.subr.mxu0 0.0
    %318 = vmatpush1.msra.mxu0 0.0
    %319 = vmatprep.subr.mxu0 0.0
    %320 = vmatpush1.msra.mxu0 0.0
    %321 = vmatprep.subr.mxu0 0.0
    %322 = vmatpush1.msra.mxu0 0.0
    %323 = vmatprep.subr.mxu0 0.0
    %324 = vmatpush1.msra.mxu0 0.0
    %325 = vmatprep.subr.mxu0 0.0
    %326 = vmatpush1.msra.mxu0 0.0
    %327 = vmatprep.subr.mxu0 0.0
    %328 = vmatpush1.msra.mxu0 0.0
    %329 = vmatprep.subr.mxu0 0.0
    %330 = vmatpush1.msra.mxu0 0.0
    %331 = vmatprep.subr.mxu0 0.0
    %332 = vmatpush1.msra.mxu0 0.0
    %333 = vmatprep.subr.mxu0 0.0
    %334 = vmatpush1.msra.mxu0 0.0
    %335 = vmatprep.subr.mxu0 0.0
    %336 = vmatpush1.msra.mxu0 0.0
    %337 = vmatprep.subr.mxu0 0.0
    %338 = vmatpush1.msra.mxu0 0.0
    %339 = vmatprep.subr.mxu0 0.0
    %340 = vmatpush1.msra.mxu0 0.0
    %341 = vmatprep.subr.mxu0 0.0
    %342 = vmatpush1.msra.mxu0 0.0
    %343 = vmatprep.subr.mxu0 0.0
    %344 = vmatpush1.msra.mxu0 0.0
    %345 = vmatprep.subr.mxu0 0.0
    %346 = vmatpush1.msra.mxu0 0.0
    %347 = vmatprep.subr.mxu0 0.0
    %348 = vmatpush1.msra.mxu0 0.0
    %349 = vmatprep.subr.mxu0 0.0
    %350 = vmatpush1.msra.mxu0 0.0
    %351 = vmatprep.subr.mxu0 0.0
    %352 = vmatpush1.msra.mxu0 0.0
    %353 = vmatprep.subr.mxu0 0.0
    %354 = vmatpush1.msra.mxu0 0.0
    %355 = vmatprep.subr.mxu0 0.0
    %356 = vmatpush1.msra.mxu0 0.0
    %357 = vmatprep.subr.mxu0 0.0
    %358 = vmatpush1.msra.mxu0 0.0
    %359 = vmatprep.subr.mxu0 0.0
    %360 = vmatpush1.msra.mxu0 0.0
    %361 = vmatprep.subr.mxu0 0.0
    %362 = vmatpush1.msra.mxu0 0.0
    %363 = vmatprep.subr.mxu0 0.0
    %364 = vmatpush1.msra.mxu0 0.0
    %365 = vmatprep.subr.mxu0 0.0
    %366 = vmatpush1.msra.mxu0 0.0
    %367 = vmatprep.mubr.f32.mxu0 0.0
    %368 = vmatmul.mubr.f32.gmra.mrb[0].mxu0 %v301
    %v369 = vpop.f32.mrb[0].mxu0
    %v370 = vadd.f32 0.0, %v369
    %v371 = vpop.f32.mrb[0].mxu0
    %372 = vdwg.mxu0
    %v374 = vsel %vm299, %v298, 0
    %376 = vmatprep.subr.mxu0 0.0
    %377 = vmatpush1.msra.mxu0 %v293
    %378 = vmatprep.subr.mxu0 0.0
    %379 = vmatpush1.msra.mxu0 %v294
    %380 = vmatprep.subr.mxu0 0.0
    %381 = vmatpush1.msra.mxu0 %v295
    %382 = vmatprep.subr.mxu0 0.0
    %383 = vmatpush1.msra.mxu0 %v296
    %384 = vmatprep.subr.mxu0 0.0
    %385 = vmatpush1.msra.mxu0 0.0
    %386 = vmatprep.subr.mxu0 0.0
    %387 = vmatpush1.msra.mxu0 0.0
    %388 = vmatprep.subr.mxu0 0.0
    %389 = vmatpush1.msra.mxu0 0.0
    %390 = vmatprep.subr.mxu0 0.0
    %391 = vmatpush1.msra.mxu0 0.0
    %392 = vmatprep.subr.mxu0 0.0
    %393 = vmatpush1.msra.mxu0 0.0
    %394 = vmatprep.subr.mxu0 0.0
    %395 = vmatpush1.msra.mxu0 0.0
    %396 = vmatprep.subr.mxu0 0.0
    %397 = vmatpush1.msra.mxu0 0.0
    %398 = vmatprep.subr.mxu0 0.0
    %399 = vmatpush1.msra.mxu0 0.0
    %400 = vmatprep.subr.mxu0 0.0
    %401 = vmatpush1.msra.mxu0 0.0
    %402 = vmatprep.subr.mxu0 0.0
    %403 = vmatpush1.msra.mxu0 0.0
    %404 = vmatprep.subr.mxu0 0.0
    %405 = vmatpush1.msra.mxu0 0.0
    %406 = vmatprep.subr.mxu0 0.0
    %407 = vmatpush1.msra.mxu0 0.0
    %408 = vmatprep.subr.mxu0 0.0
    %409 = vmatpush1.msra.mxu0 0.0
    %410 = vmatprep.subr.mxu0 0.0
    %411 = vmatpush1.msra.mxu0 0.0
    %412 = vmatprep.subr.mxu0 0.0
    %413 = vmatpush1.msra.mxu0 0.0
    %414 = vmatprep.subr.mxu0 0.0
    %415 = vmatpush1.msra.mxu0 0.0
    %416 = vmatprep.subr.mxu0 0.0
    %417 = vmatpush1.msra.mxu0 0.0
    %418 = vmatprep.subr.mxu0 0.0
    %419 = vmatpush1.msra.mxu0 0.0
    %420 = vmatprep.subr.mxu0 0.0
    %421 = vmatpush1.msra.mxu0 0.0
    %422 = vmatprep.subr.mxu0 0.0
    %423 = vmatpush1.msra.mxu0 0.0
    %424 = vmatprep.subr.mxu0 0.0
    %425 = vmatpush1.msra.mxu0 0.0
    %426 = vmatprep.subr.mxu0 0.0
    %427 = vmatpush1.msra.mxu0 0.0
    %428 = vmatprep.subr.mxu0 0.0
    %429 = vmatpush1.msra.mxu0 0.0
    %430 = vmatprep.subr.mxu0 0.0
    %431 = vmatpush1.msra.mxu0 0.0
    %432 = vmatprep.subr.mxu0 0.0
    %433 = vmatpush1.msra.mxu0 0.0
    %434 = vmatprep.subr.mxu0 0.0
    %435 = vmatpush1.msra.mxu0 0.0
    %436 = vmatprep.subr.mxu0 0.0
    %437 = vmatpush1.msra.mxu0 0.0
    %438 = vmatprep.subr.mxu0 0.0
    %439 = vmatpush1.msra.mxu0 0.0
    %440 = vmatprep.mubr.f32.mxu0 0.0
    %441 = vmatmul.mubr.f32.gmra.mrb[0].mxu0 %v374
    %v442 = vpop.f32.mrb[0].mxu0
    %v443 = vadd.f32 0.0, %v442
    %v444 = vpop.f32.mrb[0].mxu0
    %445 = vdwg.mxu0
    %v447 = vsel %vm299, %v173, 0
    %449 = vmatprep.subr.mxu0 0.0
    %450 = vmatpush1.msra.mxu0 %v165
    %451 = vmatprep.subr.mxu0 0.0
    %452 = vmatpush1.msra.mxu0 %v166
    %453 = vmatprep.subr.mxu0 0.0
    %454 = vmatpush1.msra.mxu0 %v167
    %455 = vmatprep.subr.mxu0 0.0
    %456 = vmatpush1.msra.mxu0 %v168
    %457 = vmatprep.subr.mxu0 0.0
    %458 = vmatpush1.msra.mxu0 0.0
    %459 = vmatprep.subr.mxu0 0.0
    %460 = vmatpush1.msra.mxu0 0.0
    %461 = vmatprep.subr.mxu0 0.0
    %462 = vmatpush1.msra.mxu0 0.0
    %463 = vmatprep.subr.mxu0 0.0
    %464 = vmatpush1.msra.mxu0 0.0
    %465 = vmatprep.subr.mxu0 0.0
    %466 = vmatpush1.msra.mxu0 0.0
    %467 = vmatprep.subr.mxu0 0.0
    %468 = vmatpush1.msra.mxu0 0.0
    %469 = vmatprep.subr.mxu0 0.0
    %470 = vmatpush1.msra.mxu0 0.0
    %471 = vmatprep.subr.mxu0 0.0
    %472 = vmatpush1.msra.mxu0 0.0
    %473 = vmatprep.subr.mxu0 0.0
    %474 = vmatpush1.msra.mxu0 0.0
    %475 = vmatprep.subr.mxu0 0.0
    %476 = vmatpush1.msra.mxu0 0.0
    %477 = vmatprep.subr.mxu0 0.0
    %478 = vmatpush1.msra.mxu0 0.0
    %479 = vmatprep.subr.mxu0 0.0
    %480 = vmatpush1.msra.mxu0 0.0
    %481 = vmatprep.subr.mxu0 0.0
    %482 = vmatpush1.msra.mxu0 0.0
    %483 = vmatprep.subr.mxu0 0.0
    %484 = vmatpush1.msra.mxu0 0.0
    %485 = vmatprep.subr.mxu0 0.0
    %486 = vmatpush1.msra.mxu0 0.0
    %487 = vmatprep.subr.mxu0 0.0
    %488 = vmatpush1.msra.mxu0 0.0
    %489 = vmatprep.subr.mxu0 0.0
    %490 = vmatpush1.msra.mxu0 0.0
    %491 = vmatprep.subr.mxu0 0.0
    %492 = vmatpush1.msra.mxu0 0.0
    %493 = vmatprep.subr.mxu0 0.0
    %494 = vmatpush1.msra.mxu0 0.0
    %495 = vmatprep.subr.mxu0 0.0
    %496 = vmatpush1.msra.mxu0 0.0
    %497 = vmatprep.subr.mxu0 0.0
    %498 = vmatpush1.msra.mxu0 0.0
    %499 = vmatprep.subr.mxu0 0.0
    %500 = vmatpush1.msra.mxu0 0.0
    %501 = vmatprep.subr.mxu0 0.0
    %502 = vmatpush1.msra.mxu0 0.0
    %503 = vmatprep.subr.mxu0 0.0
    %504 = vmatpush1.msra.mxu0 0.0
    %505 = vmatprep.subr.mxu0 0.0
    %506 = vmatpush1.msra.mxu0 0.0
    %507 = vmatprep.subr.mxu0 0.0
    %508 = vmatpush1.msra.mxu0 0.0
    %509 = vmatprep.subr.mxu0 0.0
    %510 = vmatpush1.msra.mxu0 0.0
    %511 = vmatprep.subr.mxu0 0.0
    %512 = vmatpush1.msra.mxu0 0.0
    %513 = vmatprep.mubr.f32.mxu0 0.0
    %514 = vmatmul.mubr.f32.gmra.mrb[0].mxu0 %v447
    %v515 = vpop.f32.mrb[0].mxu0
    %v516 = vadd.f32 %v370, %v515
    %v517 = vpop.f32.mrb[0].mxu0
    %518 = vdwg.mxu0
    %v520 = vsel %vm299, %v174, 0
    %522 = vmatprep.subr.mxu0 0.0
    %523 = vmatpush1.msra.mxu0 %v169
    %524 = vmatprep.subr.mxu0 0.0
    %525 = vmatpush1.msra.mxu0 %v170
    %526 = vmatprep.subr.mxu0 0.0
    %527 = vmatpush1.msra.mxu0 %v171
    %528 = vmatprep.subr.mxu0 0.0
    %529 = vmatpush1.msra.mxu0 %v172
    %530 = vmatprep.subr.mxu0 0.0
    %531 = vmatpush1.msra.mxu0 0.0
    %532 = vmatprep.subr.mxu0 0.0
    %533 = vmatpush1.msra.mxu0 0.0
    %534 = vmatprep.subr.mxu0 0.0
    %535 = vmatpush1.msra.mxu0 0.0
    %536 = vmatprep.subr.mxu0 0.0
    %537 = vmatpush1.msra.mxu0 0.0
    %538 = vmatprep.subr.mxu0 0.0
    %539 = vmatpush1.msra.mxu0 0.0
    %540 = vmatprep.subr.mxu0 0.0
    %541 = vmatpush1.msra.mxu0 0.0
    %542 = vmatprep.subr.mxu0 0.0
    %543 = vmatpush1.msra.mxu0 0.0
    %544 = vmatprep.subr.mxu0 0.0
    %545 = vmatpush1.msra.mxu0 0.0
    %546 = vmatprep.subr.mxu0 0.0
    %547 = vmatpush1.msra.mxu0 0.0
    %548 = vmatprep.subr.mxu0 0.0
    %549 = vmatpush1.msra.mxu0 0.0
    %550 = vmatprep.subr.mxu0 0.0
    %551 = vmatpush1.msra.mxu0 0.0
    %552 = vmatprep.subr.mxu0 0.0
    %553 = vmatpush1.msra.mxu0 0.0
    %554 = vmatprep.subr.mxu0 0.0
    %555 = vmatpush1.msra.mxu0 0.0
    %556 = vmatprep.subr.mxu0 0.0
    %557 = vmatpush1.msra.mxu0 0.0
    %558 = vmatprep.subr.mxu0 0.0
    %559 = vmatpush1.msra.mxu0 0.0
    %560 = vmatprep.subr.mxu0 0.0
    %561 = vmatpush1.msra.mxu0 0.0
    %562 = vmatprep.subr.mxu0 0.0
    %563 = vmatpush1.msra.mxu0 0.0
    %564 = vmatprep.subr.mxu0 0.0
    %565 = vmatpush1.msra.mxu0 0.0
    %566 = vmatprep.subr.mxu0 0.0
    %567 = vmatpush1.msra.mxu0 0.0
    %568 = vmatprep.subr.mxu0 0.0
    %569 = vmatpush1.msra.mxu0 0.0
    %570 = vmatprep.subr.mxu0 0.0
    %571 = vmatpush1.msra.mxu0 0.0
    %572 = vmatprep.subr.mxu0 0.0
    %573 = vmatpush1.msra.mxu0 0.0
    %574 = vmatprep.subr.mxu0 0.0
    %575 = vmatpush1.msra.mxu0 0.0
    %576 = vmatprep.subr.mxu0 0.0
    %577 = vmatpush1.msra.mxu0 0.0
    %578 = vmatprep.subr.mxu0 0.0
    %579 = vmatpush1.msra.mxu0 0.0
    %580 = vmatprep.subr.mxu0 0.0
    %581 = vmatpush1.msra.mxu0 0.0
    %582 = vmatprep.subr.mxu0 0.0
    %583 = vmatpush1.msra.mxu0 0.0
    %584 = vmatprep.subr.mxu0 0.0
    %585 = vmatpush1.msra.mxu0 0.0
    %586 = vmatprep.mubr.f32.mxu0 0.0
    %587 = vmatmul.mubr.f32.gmra.mrb[0].mxu0 %v520
    %v588 = vpop.f32.mrb[0].mxu0
    %v589 = vadd.f32 %v443, %v588
    %v590 = vpop.f32.mrb[0].mxu0
    %591 = vdwg.mxu0
    %s592 = scalar_lea.vmem %s2, 80
    %v593 = vld [vmem:[%s592] sm:$0xff]
    %v594 = vld [vmem:[%s592 + $0x8] sm:$0xff]
    %v595 = vld [vmem:[%s592 + $0x10] sm:$0xff]
    %v596 = vld [vmem:[%s592 + $0x18] sm:$0xff]
    %v597 = vld [vmem:[%s592 + $0x20] sm:$0x3]
    %v599 = vsel %vm56, %v597, 0
    %601 = vmatprep.subr.mxu0 0.0
    %602 = vmatpush1.msra.mxu0 %v593
    %603 = vmatprep.subr.mxu0 0.0
    %604 = vmatpush1.msra.mxu0 %v594
    %605 = vmatprep.subr.mxu0 0.0
    %606 = vmatpush1.msra.mxu0 %v595
    %607 = vmatprep.subr.mxu0 0.0
    %608 = vmatpush1.msra.mxu0 %v596
    %609 = vmatprep.subr.mxu0 0.0
    %610 = vmatpush1.msra.mxu0 %v599
    %611 = vmatprep.subr.mxu0 0.0
    %612 = vmatpush1.msra.mxu0 0.0
    %613 = vmatprep.subr.mxu0 0.0
    %614 = vmatpush1.msra.mxu0 0.0
    %615 = vmatprep.subr.mxu0 0.0
    %616 = vmatpush1.msra.mxu0 0.0
    %617 = vmatprep.subr.mxu0 0.0
    %618 = vmatpush1.msra.mxu0 0.0
    %619 = vmatprep.subr.mxu0 0.0
    %620 = vmatpush1.msra.mxu0 0.0
    %621 = vmatprep.subr.mxu0 0.0
    %622 = vmatpush1.msra.mxu0 0.0
    %623 = vmatprep.subr.mxu0 0.0
    %624 = vmatpush1.msra.mxu0 0.0
    %625 = vmatprep.subr.mxu0 0.0
    %626 = vmatpush1.msra.mxu0 0.0
    %627 = vmatprep.subr.mxu0 0.0
    %628 = vmatpush1.msra.mxu0 0.0
    %629 = vmatprep.subr.mxu0 0.0
    %630 = vmatpush1.msra.mxu0 0.0
    %631 = vmatprep.subr.mxu0 0.0
    %632 = vmatpush1.msra.mxu0 0.0
    %633 = vmatprep.subr.mxu0 0.0
    %634 = vmatpush1.msra.mxu0 0.0
    %635 = vmatprep.subr.mxu0 0.0
    %636 = vmatpush1.msra.mxu0 0.0
    %637 = vmatprep.subr.mxu0 0.0
    %638 = vmatpush1.msra.mxu0 0.0
    %639 = vmatprep.subr.mxu0 0.0
    %640 = vmatpush1.msra.mxu0 0.0
    %641 = vmatprep.subr.mxu0 0.0
    %642 = vmatpush1.msra.mxu0 0.0
    %643 = vmatprep.subr.mxu0 0.0
    %644 = vmatpush1.msra.mxu0 0.0
    %645 = vmatprep.subr.mxu0 0.0
    %646 = vmatpush1.msra.mxu0 0.0
    %647 = vmatprep.subr.mxu0 0.0
    %648 = vmatpush1.msra.mxu0 0.0
    %649 = vmatprep.subr.mxu0 0.0
    %650 = vmatpush1.msra.mxu0 0.0
    %651 = vmatprep.subr.mxu0 0.0
    %652 = vmatpush1.msra.mxu0 0.0
    %653 = vmatprep.subr.mxu0 0.0
    %654 = vmatpush1.msra.mxu0 0.0
    %655 = vmatprep.subr.mxu0 0.0
    %656 = vmatpush1.msra.mxu0 0.0
    %657 = vmatprep.subr.mxu0 0.0
    %658 = vmatpush1.msra.mxu0 0.0
    %659 = vmatprep.subr.mxu0 0.0
    %660 = vmatpush1.msra.mxu0 0.0
    %661 = vmatprep.subr.mxu0 0.0
    %662 = vmatpush1.msra.mxu0 0.0
    %663 = vmatprep.subr.mxu0 0.0
    %664 = vmatpush1.msra.mxu0 0.0
    %665 = vmatprep.mubr.f32.mxu0 0.0
    %666 = vmatmul.mubr.f32.gmra.mrb[0].mxu0 %v33
    %v667 = vpop.f32.mrb[0].mxu0
    %v668 = vadd.f32 0.0, %v667
    %v669 = vpop.f32.mrb[0].mxu0
    %670 = vmatprep.mubr.f32.mxu0 0.0
    %671 = vmatmul.mubr.f32.gmra.mrb[0].mxu0 %v36
    %v672 = vpop.f32.mrb[0].mxu0
    %v673 = vadd.f32 0.0, %v672
    %v674 = vpop.f32.mrb[0].mxu0
    %675 = vmatprep.mubr.f32.mxu0 0.0
    %676 = vmatmul.mubr.f32.gmra.mrb[0].mxu0 %v39
    %v677 = vpop.f32.mrb[0].mxu0
    %v678 = vadd.f32 0.0, %v677
    %v679 = vpop.f32.mrb[0].mxu0
    %680 = vmatprep.mubr.f32.mxu0 0.0
    %681 = vmatmul.mubr.f32.gmra.mrb[0].mxu0 %v42
    %v682 = vpop.f32.mrb[0].mxu0
    %v683 = vadd.f32 0.0, %v682
    %v684 = vpop.f32.mrb[0].mxu0
    %685 = vmatprep.mubr.f32.mxu0 0.0
    %686 = vmatmul.mubr.f32.gmra.mrb[0].mxu0 %v45
    %v687 = vpop.f32.mrb[0].mxu0
    %v688 = vadd.f32 0.0, %v687
    %v689 = vpop.f32.mrb[0].mxu0
    %690 = vmatprep.mubr.f32.mxu0 0.0
    %691 = vmatmul.mubr.f32.gmra.mrb[0].mxu0 %v48
    %v692 = vpop.f32.mrb[0].mxu0
    %v693 = vadd.f32 0.0, %v692
    %v694 = vpop.f32.mrb[0].mxu0
    %695 = vmatprep.mubr.f32.mxu0 0.0
    %696 = vmatmul.mubr.f32.gmra.mrb[0].mxu0 %v51
    %v697 = vpop.f32.mrb[0].mxu0
    %v698 = vadd.f32 0.0, %v697
    %v699 = vpop.f32.mrb[0].mxu0
    %700 = vmatprep.mubr.f32.mxu0 0.0
    %701 = vmatmul.mubr.f32.gmra.mrb[0].mxu0 %v54
    %v702 = vpop.f32.mrb[0].mxu0
    %v703 = vadd.f32 0.0, %v702
    %v704 = vpop.f32.mrb[0].mxu0
    %705 = vdwg.mxu0
    %v706 = vmax.f32 %v668, 0.0
    %v707 = vmax.f32 %v673, 0.0
    %v708 = vmax.f32 %v678, 0.0
    %v709 = vmax.f32 %v683, 0.0
    %v710 = vmax.f32 %v688, 0.0
    %v711 = vmax.f32 %v693, 0.0
    %v712 = vmax.f32 %v698, 0.0
    %v713 = vmax.f32 %v703, 0.0
    %v714 = vld [vmem:[%s0 + $0x2] sm:$0xff]
    %v715 = vld [vmem:[%s0 + $0x12] sm:$0xff]
    %v717 = vsel %vm299, %v714, 0
    %719 = vmatprep.subr.mxu0 0.0
    %720 = vmatpush1.msra.mxu0 %v706
    %721 = vmatprep.subr.mxu0 0.0
    %722 = vmatpush1.msra.mxu0 %v707
    %723 = vmatprep.subr.mxu0 0.0
    %724 = vmatpush1.msra.mxu0 %v708
    %725 = vmatprep.subr.mxu0 0.0
    %726 = vmatpush1.msra.mxu0 %v709
    %727 = vmatprep.subr.mxu0 0.0
    %728 = vmatpush1.msra.mxu0 0.0
    %729 = vmatprep.subr.mxu0 0.0
    %730 = vmatpush1.msra.mxu0 0.0
    %731 = vmatprep.subr.mxu0 0.0
    %732 = vmatpush1.msra.mxu0 0.0
    %733 = vmatprep.subr.mxu0 0.0
    %734 = vmatpush1.msra.mxu0 0.0
    %735 = vmatprep.subr.mxu0 0.0
    %736 = vmatpush1.msra.mxu0 0.0
    %737 = vmatprep.subr.mxu0 0.0
    %738 = vmatpush1.msra.mxu0 0.0
    %739 = vmatprep.subr.mxu0 0.0
    %740 = vmatpush1.msra.mxu0 0.0
    %741 = vmatprep.subr.mxu0 0.0
    %742 = vmatpush1.msra.mxu0 0.0
    %743 = vmatprep.subr.mxu0 0.0
    %744 = vmatpush1.msra.mxu0 0.0
    %745 = vmatprep.subr.mxu0 0.0
    %746 = vmatpush1.msra.mxu0 0.0
    %747 = vmatprep.subr.mxu0 0.0
    %748 = vmatpush1.msra.mxu0 0.0
    %749 = vmatprep.subr.mxu0 0.0
    %750 = vmatpush1.msra.mxu0 0.0
    %751 = vmatprep.subr.mxu0 0.0
    %752 = vmatpush1.msra.mxu0 0.0
    %753 = vmatprep.subr.mxu0 0.0
    %754 = vmatpush1.msra.mxu0 0.0
    %755 = vmatprep.subr.mxu0 0.0
    %756 = vmatpush1.msra.mxu0 0.0
    %757 = vmatprep.subr.mxu0 0.0
    %758 = vmatpush1.msra.mxu0 0.0
    %759 = vmatprep.subr.mxu0 0.0
    %760 = vmatpush1.msra.mxu0 0.0
    %761 = vmatprep.subr.mxu0 0.0
    %762 = vmatpush1.msra.mxu0 0.0
    %763 = vmatprep.subr.mxu0 0.0
    %764 = vmatpush1.msra.mxu0 0.0
    %765 = vmatprep.subr.mxu0 0.0
    %766 = vmatpush1.msra.mxu0 0.0
    %767 = vmatprep.subr.mxu0 0.0
    %768 = vmatpush1.msra.mxu0 0.0
    %769 = vmatprep.subr.mxu0 0.0
    %770 = vmatpush1.msra.mxu0 0.0
    %771 = vmatprep.subr.mxu0 0.0
    %772 = vmatpush1.msra.mxu0 0.0
    %773 = vmatprep.subr.mxu0 0.0
    %774 = vmatpush1.msra.mxu0 0.0
    %775 = vmatprep.subr.mxu0 0.0
    %776 = vmatpush1.msra.mxu0 0.0
    %777 = vmatprep.subr.mxu0 0.0
    %778 = vmatpush1.msra.mxu0 0.0
    %779 = vmatprep.subr.mxu0 0.0
    %780 = vmatpush1.msra.mxu0 0.0
    %781 = vmatprep.subr.mxu0 0.0
    %782 = vmatpush1.msra.mxu0 0.0
    %783 = vmatprep.mubr.f32.mxu0 0.0
    %784 = vmatmul.mubr.f32.gmra.mrb[0].mxu0 %v717
    %v785 = vpop.f32.mrb[0].mxu0
    %v786 = vadd.f32 0.0, %v785
    %v787 = vpop.f32.mrb[0].mxu0
    %788 = vdwg.mxu0
    %v790 = vsel %vm299, %v715, 0
    %792 = vmatprep.subr.mxu0 0.0
    %793 = vmatpush1.msra.mxu0 %v710
    %794 = vmatprep.subr.mxu0 0.0
    %795 = vmatpush1.msra.mxu0 %v711
    %796 = vmatprep.subr.mxu0 0.0
    %797 = vmatpush1.msra.mxu0 %v712
    %798 = vmatprep.subr.mxu0 0.0
    %799 = vmatpush1.msra.mxu0 %v713
    %800 = vmatprep.subr.mxu0 0.0
    %801 = vmatpush1.msra.mxu0 0.0
    %802 = vmatprep.subr.mxu0 0.0
    %803 = vmatpush1.msra.mxu0 0.0
    %804 = vmatprep.subr.mxu0 0.0
    %805 = vmatpush1.msra.mxu0 0.0
    %806 = vmatprep.subr.mxu0 0.0
    %807 = vmatpush1.msra.mxu0 0.0
    %808 = vmatprep.subr.mxu0 0.0
    %809 = vmatpush1.msra.mxu0 0.0
    %810 = vmatprep.subr.mxu0 0.0
    %811 = vmatpush1.msra.mxu0 0.0
    %812 = vmatprep.subr.mxu0 0.0
    %813 = vmatpush1.msra.mxu0 0.0
    %814 = vmatprep.subr.mxu0 0.0
    %815 = vmatpush1.msra.mxu0 0.0
    %816 = vmatprep.subr.mxu0 0.0
    %817 = vmatpush1.msra.mxu0 0.0
    %818 = vmatprep.subr.mxu0 0.0
    %819 = vmatpush1.msra.mxu0 0.0
    %820 = vmatprep.subr.mxu0 0.0
    %821 = vmatpush1.msra.mxu0 0.0
    %822 = vmatprep.subr.mxu0 0.0
    %823 = vmatpush1.msra.mxu0 0.0
    %824 = vmatprep.subr.mxu0 0.0
    %825 = vmatpush1.msra.mxu0 0.0
    %826 = vmatprep.subr.mxu0 0.0
    %827 = vmatpush1.msra.mxu0 0.0
    %828 = vmatprep.subr.mxu0 0.0
    %829 = vmatpush1.msra.mxu0 0.0
    %830 = vmatprep.subr.mxu0 0.0
    %831 = vmatpush1.msra.mxu0 0.0
    %832 = vmatprep.subr.mxu0 0.0
    %833 = vmatpush1.msra.mxu0 0.0
    %834 = vmatprep.subr.mxu0 0.0
    %835 = vmatpush1.msra.mxu0 0.0
    %836 = vmatprep.subr.mxu0 0.0
    %837 = vmatpush1.msra.mxu0 0.0
    %838 = vmatprep.subr.mxu0 0.0
    %839 = vmatpush1.msra.mxu0 0.0
    %840 = vmatprep.subr.mxu0 0.0
    %841 = vmatpush1.msra.mxu0 0.0
    %842 = vmatprep.subr.mxu0 0.0
    %843 = vmatpush1.msra.mxu0 0.0
    %844 = vmatprep.subr.mxu0 0.0
    %845 = vmatpush1.msra.mxu0 0.0
    %846 = vmatprep.subr.mxu0 0.0
    %847 = vmatpush1.msra.mxu0 0.0
    %848 = vmatprep.subr.mxu0 0.0
    %849 = vmatpush1.msra.mxu0 0.0
    %850 = vmatprep.subr.mxu0 0.0
    %851 = vmatpush1.msra.mxu0 0.0
    %852 = vmatprep.subr.mxu0 0.0
    %853 = vmatpush1.msra.mxu0 0.0
    %854 = vmatprep.subr.mxu0 0.0
    %855 = vmatpush1.msra.mxu0 0.0
    %856 = vmatprep.mubr.f32.mxu0 0.0
    %857 = vmatmul.mubr.f32.gmra.mrb[0].mxu0 %v790
    %v858 = vpop.f32.mrb[0].mxu0
    %v859 = vadd.f32 0.0, %v858
    %v860 = vpop.f32.mrb[0].mxu0
    %861 = vdwg.mxu0
    %v862 = vadd.f32 %v516, %v786
    %v863 = vadd.f32 %v589, %v859
    %s864 = scalar_lea.vmem %s2, 120
    %v865 = vld [vmem:[%s864] sm:$0xff]
    %v866 = vld [vmem:[%s864 + $0x8] sm:$0xff]
    %v867 = vld [vmem:[%s864 + $0x10] sm:$0xff]
    %v868 = vld [vmem:[%s864 + $0x18] sm:$0xff]
    %v869 = vld [vmem:[%s864 + $0x20] sm:$0x3]
    %v871 = vsel %vm56, %v869, 0
    %873 = vmatprep.subr.mxu0 0.0
    %874 = vmatpush1.msra.mxu0 %v865
    %875 = vmatprep.subr.mxu0 0.0
    %876 = vmatpush1.msra.mxu0 %v866
    %877 = vmatprep.subr.mxu0 0.0
    %878 = vmatpush1.msra.mxu0 %v867
    %879 = vmatprep.subr.mxu0 0.0
    %880 = vmatpush1.msra.mxu0 %v868
    %881 = vmatprep.subr.mxu0 0.0
    %882 = vmatpush1.msra.mxu0 %v871
    %883 = vmatprep.subr.mxu0 0.0
    %884 = vmatpush1.msra.mxu0 0.0
    %885 = vmatprep.subr.mxu0 0.0
    %886 = vmatpush1.msra.mxu0 0.0
    %887 = vmatprep.subr.mxu0 0.0
    %888 = vmatpush1.msra.mxu0 0.0
    %889 = vmatprep.subr.mxu0 0.0
    %890 = vmatpush1.msra.mxu0 0.0
    %891 = vmatprep.subr.mxu0 0.0
    %892 = vmatpush1.msra.mxu0 0.0
    %893 = vmatprep.subr.mxu0 0.0
    %894 = vmatpush1.msra.mxu0 0.0
    %895 = vmatprep.subr.mxu0 0.0
    %896 = vmatpush1.msra.mxu0 0.0
    %897 = vmatprep.subr.mxu0 0.0
    %898 = vmatpush1.msra.mxu0 0.0
    %899 = vmatprep.subr.mxu0 0.0
    %900 = vmatpush1.msra.mxu0 0.0
    %901 = vmatprep.subr.mxu0 0.0
    %902 = vmatpush1.msra.mxu0 0.0
    %903 = vmatprep.subr.mxu0 0.0
    %904 = vmatpush1.msra.mxu0 0.0
    %905 = vmatprep.subr.mxu0 0.0
    %906 = vmatpush1.msra.mxu0 0.0
    %907 = vmatprep.subr.mxu0 0.0
    %908 = vmatpush1.msra.mxu0 0.0
    %909 = vmatprep.subr.mxu0 0.0
    %910 = vmatpush1.msra.mxu0 0.0
    %911 = vmatprep.subr.mxu0 0.0
    %912 = vmatpush1.msra.mxu0 0.0
    %913 = vmatprep.subr.mxu0 0.0
    %914 = vmatpush1.msra.mxu0 0.0
    %915 = vmatprep.subr.mxu0 0.0
    %916 = vmatpush1.msra.mxu0 0.0
    %917 = vmatprep.subr.mxu0 0.0
    %918 = vmatpush1.msra.mxu0 0.0
    %919 = vmatprep.subr.mxu0 0.0
    %920 = vmatpush1.msra.mxu0 0.0
    %921 = vmatprep.subr.mxu0 0.0
    %922 = vmatpush1.msra.mxu0 0.0
    %923 = vmatprep.subr.mxu0 0.0
    %924 = vmatpush1.msra.mxu0 0.0
    %925 = vmatprep.subr.mxu0 0.0
    %926 = vmatpush1.msra.mxu0 0.0
    %927 = vmatprep.subr.mxu0 0.0
    %928 = vmatpush1.msra.mxu0 0.0
    %929 = vmatprep.subr.mxu0 0.0
    %930 = vmatpush1.msra.mxu0 0.0
    %931 = vmatprep.subr.mxu0 0.0
    %932 = vmatpush1.msra.mxu0 0.0
    %933 = vmatprep.subr.mxu0 0.0
    %934 = vmatpush1.msra.mxu0 0.0
    %935 = vmatprep.subr.mxu0 0.0
    %936 = vmatpush1.msra.mxu0 0.0
    %937 = vmatprep.mubr.f32.mxu0 0.0
    %938 = vmatmul.mubr.f32.gmra.mrb[0].mxu0 %v33
    %v939 = vpop.f32.mrb[0].mxu0
    %v940 = vadd.f32 0.0, %v939
    %v941 = vpop.f32.mrb[0].mxu0
    %942 = vmatprep.mubr.f32.mxu0 0.0
    %943 = vmatmul.mubr.f32.gmra.mrb[0].mxu0 %v36
    %v944 = vpop.f32.mrb[0].mxu0
    %v945 = vadd.f32 0.0, %v944
    %v946 = vpop.f32.mrb[0].mxu0
    %947 = vmatprep.mubr.f32.mxu0 0.0
    %948 = vmatmul.mubr.f32.gmra.mrb[0].mxu0 %v39
    %v949 = vpop.f32.mrb[0].mxu0
    %v950 = vadd.f32 0.0, %v949
    %v951 = vpop.f32.mrb[0].mxu0
    %952 = vmatprep.mubr.f32.mxu0 0.0
    %953 = vmatmul.mubr.f32.gmra.mrb[0].mxu0 %v42
    %v954 = vpop.f32.mrb[0].mxu0
    %v955 = vadd.f32 0.0, %v954
    %v956 = vpop.f32.mrb[0].mxu0
    %957 = vmatprep.mubr.f32.mxu0 0.0
    %958 = vmatmul.mubr.f32.gmra.mrb[0].mxu0 %v45
    %v959 = vpop.f32.mrb[0].mxu0
    %v960 = vadd.f32 0.0, %v959
    %v961 = vpop.f32.mrb[0].mxu0
    %962 = vmatprep.mubr.f32.mxu0 0.0
    %963 = vmatmul.mubr.f32.gmra.mrb[0].mxu0 %v48
    %v964 = vpop.f32.mrb[0].mxu0
    %v965 = vadd.f32 0.0, %v964
    %v966 = vpop.f32.mrb[0].mxu0
    %967 = vmatprep.mubr.f32.mxu0 0.0
    %968 = vmatmul.mubr.f32.gmra.mrb[0].mxu0 %v51
    %v969 = vpop.f32.mrb[0].mxu0
    %v970 = vadd.f32 0.0, %v969
    %v971 = vpop.f32.mrb[0].mxu0
    %972 = vmatprep.mubr.f32.mxu0 0.0
    %973 = vmatmul.mubr.f32.gmra.mrb[0].mxu0 %v54
    %v974 = vpop.f32.mrb[0].mxu0
    %v975 = vadd.f32 0.0, %v974
    %v976 = vpop.f32.mrb[0].mxu0
    %977 = vdwg.mxu0
    %v978 = vmax.f32 %v940, 0.0
    %v979 = vmax.f32 %v945, 0.0
    %v980 = vmax.f32 %v950, 0.0
    %v981 = vmax.f32 %v955, 0.0
    %v982 = vmax.f32 %v960, 0.0
    %v983 = vmax.f32 %v965, 0.0
    %v984 = vmax.f32 %v970, 0.0
    %v985 = vmax.f32 %v975, 0.0
    %v986 = vld [vmem:[%s0 + $0x3] sm:$0xff]
    %v987 = vld [vmem:[%s0 + $0x13] sm:$0xff]
    %v989 = vsel %vm299, %v986, 0
    %991 = vmatprep.subr.mxu0 0.0
    %992 = vmatpush1.msra.mxu0 %v978
    %993 = vmatprep.subr.mxu0 0.0
    %994 = vmatpush1.msra.mxu0 %v979
    %995 = vmatprep.subr.mxu0 0.0
    %996 = vmatpush1.msra.mxu0 %v980
    %997 = vmatprep.subr.mxu0 0.0
    %998 = vmatpush1.msra.mxu0 %v981
    %999 = vmatprep.subr.mxu0 0.0
    %1000 = vmatpush1.msra.mxu0 0.0
    %1001 = vmatprep.subr.mxu0 0.0
    %1002 = vmatpush1.msra.mxu0 0.0
    %1003 = vmatprep.subr.mxu0 0.0
    %1004 = vmatpush1.msra.mxu0 0.0
    %1005 = vmatprep.subr.mxu0 0.0
    %1006 = vmatpush1.msra.mxu0 0.0
    %1007 = vmatprep.subr.mxu0 0.0
    %1008 = vmatpush1.msra.mxu0 0.0
    %1009 = vmatprep.subr.mxu0 0.0
    %1010 = vmatpush1.msra.mxu0 0.0
    %1011 = vmatprep.subr.mxu0 0.0
    %1012 = vmatpush1.msra.mxu0 0.0
    %1013 = vmatprep.subr.mxu0 0.0
    %1014 = vmatpush1.msra.mxu0 0.0
    %1015 = vmatprep.subr.mxu0 0.0
    %1016 = vmatpush1.msra.mxu0 0.0
    %1017 = vmatprep.subr.mxu0 0.0
    %1018 = vmatpush1.msra.mxu0 0.0
    %1019 = vmatprep.subr.mxu0 0.0
    %1020 = vmatpush1.msra.mxu0 0.0
    %1021 = vmatprep.subr.mxu0 0.0
    %1022 = vmatpush1.msra.mxu0 0.0
    %1023 = vmatprep.subr.mxu0 0.0
    %1024 = vmatpush1.msra.mxu0 0.0
    %1025 = vmatprep.subr.mxu0 0.0
    %1026 = vmatpush1.msra.mxu0 0.0
    %1027 = vmatprep.subr.mxu0 0.0
    %1028 = vmatpush1.msra.mxu0 0.0
    %1029 = vmatprep.subr.mxu0 0.0
    %1030 = vmatpush1.msra.mxu0 0.0
    %1031 = vmatprep.subr.mxu0 0.0
    %1032 = vmatpush1.msra.mxu0 0.0
    %1033 = vmatprep.subr.mxu0 0.0
    %1034 = vmatpush1.msra.mxu0 0.0
    %1035 = vmatprep.subr.mxu0 0.0
    %1036 = vmatpush1.msra.mxu0 0.0
    %1037 = vmatprep.subr.mxu0 0.0
    %1038 = vmatpush1.msra.mxu0 0.0
    %1039 = vmatprep.subr.mxu0 0.0
    %1040 = vmatpush1.msra.mxu0 0.0
    %1041 = vmatprep.subr.mxu0 0.0
    %1042 = vmatpush1.msra.mxu0 0.0
    %1043 = vmatprep.subr.mxu0 0.0
    %1044 = vmatpush1.msra.mxu0 0.0
    %1045 = vmatprep.subr.mxu0 0.0
    %1046 = vmatpush1.msra.mxu0 0.0
    %1047 = vmatprep.subr.mxu0 0.0
    %1048 = vmatpush1.msra.mxu0 0.0
    %1049 = vmatprep.subr.mxu0 0.0
    %1050 = vmatpush1.msra.mxu0 0.0
    %1051 = vmatprep.subr.mxu0 0.0
    %1052 = vmatpush1.msra.mxu0 0.0
    %1053 = vmatprep.subr.mxu0 0.0
    %1054 = vmatpush1.msra.mxu0 0.0
    %1055 = vmatprep.mubr.f32.mxu0 0.0
    %1056 = vmatmul.mubr.f32.gmra.mrb[0].mxu0 %v989
    %v1057 = vpop.f32.mrb[0].mxu0
    %v1058 = vadd.f32 0.0, %v1057
    %v1059 = vpop.f32.mrb[0].mxu0
    %1060 = vdwg.mxu0
    %v1062 = vsel %vm299, %v987, 0
    %1064 = vmatprep.subr.mxu0 0.0
    %1065 = vmatpush1.msra.mxu0 %v982
    %1066 = vmatprep.subr.mxu0 0.0
    %1067 = vmatpush1.msra.mxu0 %v983
    %1068 = vmatprep.subr.mxu0 0.0
    %1069 = vmatpush1.msra.mxu0 %v984
    %1070 = vmatprep.subr.mxu0 0.0
    %1071 = vmatpush1.msra.mxu0 %v985
    %1072 = vmatprep.subr.mxu0 0.0
    %1073 = vmatpush1.msra.mxu0 0.0
    %1074 = vmatprep.subr.mxu0 0.0
    %1075 = vmatpush1.msra.mxu0 0.0
    %1076 = vmatprep.subr.mxu0 0.0
    %1077 = vmatpush1.msra.mxu0 0.0
    %1078 = vmatprep.subr.mxu0 0.0
    %1079 = vmatpush1.msra.mxu0 0.0
    %1080 = vmatprep.subr.mxu0 0.0
    %1081 = vmatpush1.msra.mxu0 0.0
    %1082 = vmatprep.subr.mxu0 0.0
    %1083 = vmatpush1.msra.mxu0 0.0
    %1084 = vmatprep.subr.mxu0 0.0
    %1085 = vmatpush1.msra.mxu0 0.0
    %1086 = vmatprep.subr.mxu0 0.0
    %1087 = vmatpush1.msra.mxu0 0.0
    %1088 = vmatprep.subr.mxu0 0.0
    %1089 = vmatpush1.msra.mxu0 0.0
    %1090 = vmatprep.subr.mxu0 0.0
    %1091 = vmatpush1.msra.mxu0 0.0
    %1092 = vmatprep.subr.mxu0 0.0
    %1093 = vmatpush1.msra.mxu0 0.0
    %1094 = vmatprep.subr.mxu0 0.0
    %1095 = vmatpush1.msra.mxu0 0.0
    %1096 = vmatprep.subr.mxu0 0.0
    %1097 = vmatpush1.msra.mxu0 0.0
    %1098 = vmatprep.subr.mxu0 0.0
    %1099 = vmatpush1.msra.mxu0 0.0
    %1100 = vmatprep.subr.mxu0 0.0
    %1101 = vmatpush1.msra.mxu0 0.0
    %1102 = vmatprep.subr.mxu0 0.0
    %1103 = vmatpush1.msra.mxu0 0.0
    %1104 = vmatprep.subr.mxu0 0.0
    %1105 = vmatpush1.msra.mxu0 0.0
    %1106 = vmatprep.subr.mxu0 0.0
    %1107 = vmatpush1.msra.mxu0 0.0
    %1108 = vmatprep.subr.mxu0 0.0
    %1109 = vmatpush1.msra.mxu0 0.0
    %1110 = vmatprep.subr.mxu0 0.0
    %1111 = vmatpush1.msra.mxu0 0.0
    %1112 = vmatprep.subr.mxu0 0.0
    %1113 = vmatpush1.msra.mxu0 0.0
    %1114 = vmatprep.subr.mxu0 0.0
    %1115 = vmatpush1.msra.mxu0 0.0
    %1116 = vmatprep.subr.mxu0 0.0
    %1117 = vmatpush1.msra.mxu0 0.0
    %1118 = vmatprep.subr.mxu0 0.0
    %1119 = vmatpush1.msra.mxu0 0.0
    %1120 = vmatprep.subr.mxu0 0.0
    %1121 = vmatpush1.msra.mxu0 0.0
    %1122 = vmatprep.subr.mxu0 0.0
    %1123 = vmatpush1.msra.mxu0 0.0
    %1124 = vmatprep.subr.mxu0 0.0
    %1125 = vmatpush1.msra.mxu0 0.0
    %1126 = vmatprep.subr.mxu0 0.0
    %1127 = vmatpush1.msra.mxu0 0.0
    %1128 = vmatprep.mubr.f32.mxu0 0.0
    %1129 = vmatmul.mubr.f32.gmra.mrb[0].mxu0 %v1062
    %v1130 = vpop.f32.mrb[0].mxu0
    %v1131 = vadd.f32 0.0, %v1130
    %v1132 = vpop.f32.mrb[0].mxu0
    %1133 = vdwg.mxu0
    %v1134 = vadd.f32 %v862, %v1058
    %v1135 = vadd.f32 %v863, %v1131
    %s1136 = scalar_lea.vmem %s2, 160
    %v1137 = vld [vmem:[%s1136] sm:$0xff]
    %v1138 = vld [vmem:[%s1136 + $0x8] sm:$0xff]
    %v1139 = vld [vmem:[%s1136 + $0x10] sm:$0xff]
    %v1140 = vld [vmem:[%s1136 + $0x18] sm:$0xff]
    %v1141 = vld [vmem:[%s1136 + $0x20] sm:$0x3]
    %v1143 = vsel %vm56, %v1141, 0
    %1145 = vmatprep.subr.mxu0 0.0
    %1146 = vmatpush1.msra.mxu0 %v1137
    %1147 = vmatprep.subr.mxu0 0.0
    %1148 = vmatpush1.msra.mxu0 %v1138
    %1149 = vmatprep.subr.mxu0 0.0
    %1150 = vmatpush1.msra.mxu0 %v1139
    %1151 = vmatprep.subr.mxu0 0.0
    %1152 = vmatpush1.msra.mxu0 %v1140
    %1153 = vmatprep.subr.mxu0 0.0
    %1154 = vmatpush1.msra.mxu0 %v1143
    %1155 = vmatprep.subr.mxu0 0.0
    %1156 = vmatpush1.msra.mxu0 0.0
    %1157 = vmatprep.subr.mxu0 0.0
    %1158 = vmatpush1.msra.mxu0 0.0
    %1159 = vmatprep.subr.mxu0 0.0
    %1160 = vmatpush1.msra.mxu0 0.0
    %1161 = vmatprep.subr.mxu0 0.0
    %1162 = vmatpush1.msra.mxu0 0.0
    %1163 = vmatprep.subr.mxu0 0.0
    %1164 = vmatpush1.msra.mxu0 0.0
    %1165 = vmatprep.subr.mxu0 0.0
    %1166 = vmatpush1.msra.mxu0 0.0
    %1167 = vmatprep.subr.mxu0 0.0
    %1168 = vmatpush1.msra.mxu0 0.0
    %1169 = vmatprep.subr.mxu0 0.0
    %1170 = vmatpush1.msra.mxu0 0.0
    %1171 = vmatprep.subr.mxu0 0.0
    %1172 = vmatpush1.msra.mxu0 0.0
    %1173 = vmatprep.subr.mxu0 0.0
    %1174 = vmatpush1.msra.mxu0 0.0
    %1175 = vmatprep.subr.mxu0 0.0
    %1176 = vmatpush1.msra.mxu0 0.0
    %1177 = vmatprep.subr.mxu0 0.0
    %1178 = vmatpush1.msra.mxu0 0.0
    %1179 = vmatprep.subr.mxu0 0.0
    %1180 = vmatpush1.msra.mxu0 0.0
    %1181 = vmatprep.subr.mxu0 0.0
    %1182 = vmatpush1.msra.mxu0 0.0
    %1183 = vmatprep.subr.mxu0 0.0
    %1184 = vmatpush1.msra.mxu0 0.0
    %1185 = vmatprep.subr.mxu0 0.0
    %1186 = vmatpush1.msra.mxu0 0.0
    %1187 = vmatprep.subr.mxu0 0.0
    %1188 = vmatpush1.msra.mxu0 0.0
    %1189 = vmatprep.subr.mxu0 0.0
    %1190 = vmatpush1.msra.mxu0 0.0
    %1191 = vmatprep.subr.mxu0 0.0
    %1192 = vmatpush1.msra.mxu0 0.0
    %1193 = vmatprep.subr.mxu0 0.0
    %1194 = vmatpush1.msra.mxu0 0.0
    %1195 = vmatprep.subr.mxu0 0.0
    %1196 = vmatpush1.msra.mxu0 0.0
    %1197 = vmatprep.subr.mxu0 0.0
    %1198 = vmatpush1.msra.mxu0 0.0
    %1199 = vmatprep.subr.mxu0 0.0
    %1200 = vmatpush1.msra.mxu0 0.0
    %1201 = vmatprep.subr.mxu0 0.0
    %1202 = vmatpush1.msra.mxu0 0.0
    %1203 = vmatprep.subr.mxu0 0.0
    %1204 = vmatpush1.msra.mxu0 0.0
    %1205 = vmatprep.subr.mxu0 0.0
    %1206 = vmatpush1.msra.mxu0 0.0
    %1207 = vmatprep.subr.mxu0 0.0
    %1208 = vmatpush1.msra.mxu0 0.0
    %1209 = vmatprep.mubr.f32.mxu0 0.0
    %1210 = vmatmul.mubr.f32.gmra.mrb[0].mxu0 %v33
    %v1211 = vpop.f32.mrb[0].mxu0
    %v1212 = vadd.f32 0.0, %v1211
    %v1213 = vpop.f32.mrb[0].mxu0
    %1214 = vmatprep.mubr.f32.mxu0 0.0
    %1215 = vmatmul.mubr.f32.gmra.mrb[0].mxu0 %v36
    %v1216 = vpop.f32.mrb[0].mxu0
    %v1217 = vadd.f32 0.0, %v1216
    %v1218 = vpop.f32.mrb[0].mxu0
    %1219 = vmatprep.mubr.f32.mxu0 0.0
    %1220 = vmatmul.mubr.f32.gmra.mrb[0].mxu0 %v39
    %v1221 = vpop.f32.mrb[0].mxu0
    %v1222 = vadd.f32 0.0, %v1221
    %v1223 = vpop.f32.mrb[0].mxu0
    %1224 = vmatprep.mubr.f32.mxu0 0.0
    %1225 = vmatmul.mubr.f32.gmra.mrb[0].mxu0 %v42
    %v1226 = vpop.f32.mrb[0].mxu0
    %v1227 = vadd.f32 0.0, %v1226
    %v1228 = vpop.f32.mrb[0].mxu0
    %1229 = vmatprep.mubr.f32.mxu0 0.0
    %1230 = vmatmul.mubr.f32.gmra.mrb[0].mxu0 %v45
    %v1231 = vpop.f32.mrb[0].mxu0
    %v1232 = vadd.f32 0.0, %v1231
    %v1233 = vpop.f32.mrb[0].mxu0
    %1234 = vmatprep.mubr.f32.mxu0 0.0
    %1235 = vmatmul.mubr.f32.gmra.mrb[0].mxu0 %v48
    %v1236 = vpop.f32.mrb[0].mxu0
    %v1237 = vadd.f32 0.0, %v1236
    %v1238 = vpop.f32.mrb[0].mxu0
    %1239 = vmatprep.mubr.f32.mxu0 0.0
    %1240 = vmatmul.mubr.f32.gmra.mrb[0].mxu0 %v51
    %v1241 = vpop.f32.mrb[0].mxu0
    %v1242 = vadd.f32 0.0, %v1241
    %v1243 = vpop.f32.mrb[0].mxu0
    %1244 = vmatprep.mubr.f32.mxu0 0.0
    %1245 = vmatmul.mubr.f32.gmra.mrb[0].mxu0 %v54
    %v1246 = vpop.f32.mrb[0].mxu0
    %v1247 = vadd.f32 0.0, %v1246
    %v1248 = vpop.f32.mrb[0].mxu0
    %1249 = vdwg.mxu0
    %v1250 = vmax.f32 %v1212, 0.0
    %v1251 = vmax.f32 %v1217, 0.0
    %v1252 = vmax.f32 %v1222, 0.0
    %v1253 = vmax.f32 %v1227, 0.0
    %v1254 = vmax.f32 %v1232, 0.0
    %v1255 = vmax.f32 %v1237, 0.0
    %v1256 = vmax.f32 %v1242, 0.0
    %v1257 = vmax.f32 %v1247, 0.0
    %v1258 = vld [vmem:[%s0 + $0x4] sm:$0xff]
    %v1259 = vld [vmem:[%s0 + $0x14] sm:$0xff]
    %v1261 = vsel %vm299, %v1258, 0
    %1263 = vmatprep.subr.mxu0 0.0
    %1264 = vmatpush1.msra.mxu0 %v1250
    %1265 = vmatprep.subr.mxu0 0.0
    %1266 = vmatpush1.msra.mxu0 %v1251
    %1267 = vmatprep.subr.mxu0 0.0
    %1268 = vmatpush1.msra.mxu0 %v1252
    %1269 = vmatprep.subr.mxu0 0.0
    %1270 = vmatpush1.msra.mxu0 %v1253
    %1271 = vmatprep.subr.mxu0 0.0
    %1272 = vmatpush1.msra.mxu0 0.0
    %1273 = vmatprep.subr.mxu0 0.0
    %1274 = vmatpush1.msra.mxu0 0.0
    %1275 = vmatprep.subr.mxu0 0.0
    %1276 = vmatpush1.msra.mxu0 0.0
    %1277 = vmatprep.subr.mxu0 0.0
    %1278 = vmatpush1.msra.mxu0 0.0
    %1279 = vmatprep.subr.mxu0 0.0
    %1280 = vmatpush1.msra.mxu0 0.0
    %1281 = vmatprep.subr.mxu0 0.0
    %1282 = vmatpush1.msra.mxu0 0.0
    %1283 = vmatprep.subr.mxu0 0.0
    %1284 = vmatpush1.msra.mxu0 0.0
    %1285 = vmatprep.subr.mxu0 0.0
    %1286 = vmatpush1.msra.mxu0 0.0
    %1287 = vmatprep.subr.mxu0 0.0
    %1288 = vmatpush1.msra.mxu0 0.0
    %1289 = vmatprep.subr.mxu0 0.0
    %1290 = vmatpush1.msra.mxu0 0.0
    %1291 = vmatprep.subr.mxu0 0.0
    %1292 = vmatpush1.msra.mxu0 0.0
    %1293 = vmatprep.subr.mxu0 0.0
    %1294 = vmatpush1.msra.mxu0 0.0
    %1295 = vmatprep.subr.mxu0 0.0
    %1296 = vmatpush1.msra.mxu0 0.0
    %1297 = vmatprep.subr.mxu0 0.0
    %1298 = vmatpush1.msra.mxu0 0.0
    %1299 = vmatprep.subr.mxu0 0.0
    %1300 = vmatpush1.msra.mxu0 0.0
    %1301 = vmatprep.subr.mxu0 0.0
    %1302 = vmatpush1.msra.mxu0 0.0
    %1303 = vmatprep.subr.mxu0 0.0
    %1304 = vmatpush1.msra.mxu0 0.0
    %1305 = vmatprep.subr.mxu0 0.0
    %1306 = vmatpush1.msra.mxu0 0.0
    %1307 = vmatprep.subr.mxu0 0.0
    %1308 = vmatpush1.msra.mxu0 0.0
    %1309 = vmatprep.subr.mxu0 0.0
    %1310 = vmatpush1.msra.mxu0 0.0
    %1311 = vmatprep.subr.mxu0 0.0
    %1312 = vmatpush1.msra.mxu0 0.0
    %1313 = vmatprep.subr.mxu0 0.0
    %1314 = vmatpush1.msra.mxu0 0.0
    %1315 = vmatprep.subr.mxu0 0.0
    %1316 = vmatpush1.msra.mxu0 0.0
    %1317 = vmatprep.subr.mxu0 0.0
    %1318 = vmatpush1.msra.mxu0 0.0
    %1319 = vmatprep.subr.mxu0 0.0
    %1320 = vmatpush1.msra.mxu0 0.0
    %1321 = vmatprep.subr.mxu0 0.0
    %1322 = vmatpush1.msra.mxu0 0.0
    %1323 = vmatprep.subr.mxu0 0.0
    %1324 = vmatpush1.msra.mxu0 0.0
    %1325 = vmatprep.subr.mxu0 0.0
    %1326 = vmatpush1.msra.mxu0 0.0
    %1327 = vmatprep.mubr.f32.mxu0 0.0
    %1328 = vmatmul.mubr.f32.gmra.mrb[0].mxu0 %v1261
    %v1329 = vpop.f32.mrb[0].mxu0
    %v1330 = vadd.f32 0.0, %v1329
    %v1331 = vpop.f32.mrb[0].mxu0
    %1332 = vdwg.mxu0
    %v1334 = vsel %vm299, %v1259, 0
    %1336 = vmatprep.subr.mxu0 0.0
    %1337 = vmatpush1.msra.mxu0 %v1254
    %1338 = vmatprep.subr.mxu0 0.0
    %1339 = vmatpush1.msra.mxu0 %v1255
    %1340 = vmatprep.subr.mxu0 0.0
    %1341 = vmatpush1.msra.mxu0 %v1256
    %1342 = vmatprep.subr.mxu0 0.0
    %1343 = vmatpush1.msra.mxu0 %v1257
    %1344 = vmatprep.subr.mxu0 0.0
    %1345 = vmatpush1.msra.mxu0 0.0
    %1346 = vmatprep.subr.mxu0 0.0
    %1347 = vmatpush1.msra.mxu0 0.0
    %1348 = vmatprep.subr.mxu0 0.0
    %1349 = vmatpush1.msra.mxu0 0.0
    %1350 = vmatprep.subr.mxu0 0.0
    %1351 = vmatpush1.msra.mxu0 0.0
    %1352 = vmatprep.subr.mxu0 0.0
    %1353 = vmatpush1.msra.mxu0 0.0
    %1354 = vmatprep.subr.mxu0 0.0
    %1355 = vmatpush1.msra.mxu0 0.0
    %1356 = vmatprep.subr.mxu0 0.0
    %1357 = vmatpush1.msra.mxu0 0.0
    %1358 = vmatprep.subr.mxu0 0.0
    %1359 = vmatpush1.msra.mxu0 0.0
    %1360 = vmatprep.subr.mxu0 0.0
    %1361 = vmatpush1.msra.mxu0 0.0
    %1362 = vmatprep.subr.mxu0 0.0
    %1363 = vmatpush1.msra.mxu0 0.0
    %1364 = vmatprep.subr.mxu0 0.0
    %1365 = vmatpush1.msra.mxu0 0.0
    %1366 = vmatprep.subr.mxu0 0.0
    %1367 = vmatpush1.msra.mxu0 0.0
    %1368 = vmatprep.subr.mxu0 0.0
    %1369 = vmatpush1.msra.mxu0 0.0
    %1370 = vmatprep.subr.mxu0 0.0
    %1371 = vmatpush1.msra.mxu0 0.0
    %1372 = vmatprep.subr.mxu0 0.0
    %1373 = vmatpush1.msra.mxu0 0.0
    %1374 = vmatprep.subr.mxu0 0.0
    %1375 = vmatpush1.msra.mxu0 0.0
    %1376 = vmatprep.subr.mxu0 0.0
    %1377 = vmatpush1.msra.mxu0 0.0
    %1378 = vmatprep.subr.mxu0 0.0
    %1379 = vmatpush1.msra.mxu0 0.0
    %1380 = vmatprep.subr.mxu0 0.0
    %1381 = vmatpush1.msra.mxu0 0.0
    %1382 = vmatprep.subr.mxu0 0.0
    %1383 = vmatpush1.msra.mxu0 0.0
    %1384 = vmatprep.subr.mxu0 0.0
    %1385 = vmatpush1.msra.mxu0 0.0
    %1386 = vmatprep.subr.mxu0 0.0
    %1387 = vmatpush1.msra.mxu0 0.0
    %1388 = vmatprep.subr.mxu0 0.0
    %1389 = vmatpush1.msra.mxu0 0.0
    %1390 = vmatprep.subr.mxu0 0.0
    %1391 = vmatpush1.msra.mxu0 0.0
    %1392 = vmatprep.subr.mxu0 0.0
    %1393 = vmatpush1.msra.mxu0 0.0
    %1394 = vmatprep.subr.mxu0 0.0
    %1395 = vmatpush1.msra.mxu0 0.0
    %1396 = vmatprep.subr.mxu0 0.0
    %1397 = vmatpush1.msra.mxu0 0.0
    %1398 = vmatprep.subr.mxu0 0.0
    %1399 = vmatpush1.msra.mxu0 0.0
    %1400 = vmatprep.mubr.f32.mxu0 0.0
    %1401 = vmatmul.mubr.f32.gmra.mrb[0].mxu0 %v1334
    %v1402 = vpop.f32.mrb[0].mxu0
    %v1403 = vadd.f32 0.0, %v1402
    %v1404 = vpop.f32.mrb[0].mxu0
    %1405 = vdwg.mxu0
    %v1406 = vadd.f32 %v1134, %v1330
    %v1407 = vadd.f32 %v1135, %v1403
    %s1408 = scalar_lea.vmem %s2, 200
    %v1409 = vld [vmem:[%s1408] sm:$0xff]
    %v1410 = vld [vmem:[%s1408 + $0x8] sm:$0xff]
    %v1411 = vld [vmem:[%s1408 + $0x10] sm:$0xff]
    %v1412 = vld [vmem:[%s1408 + $0x18] sm:$0xff]
    %v1413 = vld [vmem:[%s1408 + $0x20] sm:$0x3]
    %v1415 = vsel %vm56, %v1413, 0
    %1417 = vmatprep.subr.mxu0 0.0
    %1418 = vmatpush1.msra.mxu0 %v1409
    %1419 = vmatprep.subr.mxu0 0.0
    %1420 = vmatpush1.msra.mxu0 %v1410
    %1421 = vmatprep.subr.mxu0 0.0
    %1422 = vmatpush1.msra.mxu0 %v1411
    %1423 = vmatprep.subr.mxu0 0.0
    %1424 = vmatpush1.msra.mxu0 %v1412
    %1425 = vmatprep.subr.mxu0 0.0
    %1426 = vmatpush1.msra.mxu0 %v1415
    %1427 = vmatprep.subr.mxu0 0.0
    %1428 = vmatpush1.msra.mxu0 0.0
    %1429 = vmatprep.subr.mxu0 0.0
    %1430 = vmatpush1.msra.mxu0 0.0
    %1431 = vmatprep.subr.mxu0 0.0
    %1432 = vmatpush1.msra.mxu0 0.0
    %1433 = vmatprep.subr.mxu0 0.0
    %1434 = vmatpush1.msra.mxu0 0.0
    %1435 = vmatprep.subr.mxu0 0.0
    %1436 = vmatpush1.msra.mxu0 0.0
    %1437 = vmatprep.subr.mxu0 0.0
    %1438 = vmatpush1.msra.mxu0 0.0
    %1439 = vmatprep.subr.mxu0 0.0
    %1440 = vmatpush1.msra.mxu0 0.0
    %1441 = vmatprep.subr.mxu0 0.0
    %1442 = vmatpush1.msra.mxu0 0.0
    %1443 = vmatprep.subr.mxu0 0.0
    %1444 = vmatpush1.msra.mxu0 0.0
    %1445 = vmatprep.subr.mxu0 0.0
    %1446 = vmatpush1.msra.mxu0 0.0
    %1447 = vmatprep.subr.mxu0 0.0
    %1448 = vmatpush1.msra.mxu0 0.0
    %1449 = vmatprep.subr.mxu0 0.0
    %1450 = vmatpush1.msra.mxu0 0.0
    %1451 = vmatprep.subr.mxu0 0.0
    %1452 = vmatpush1.msra.mxu0 0.0
    %1453 = vmatprep.subr.mxu0 0.0
    %1454 = vmatpush1.msra.mxu0 0.0
    %1455 = vmatprep.subr.mxu0 0.0
    %1456 = vmatpush1.msra.mxu0 0.0
    %1457 = vmatprep.subr.mxu0 0.0
    %1458 = vmatpush1.msra.mxu0 0.0
    %1459 = vmatprep.subr.mxu0 0.0
    %1460 = vmatpush1.msra.mxu0 0.0
    %1461 = vmatprep.subr.mxu0 0.0
    %1462 = vmatpush1.msra.mxu0 0.0
    %1463 = vmatprep.subr.mxu0 0.0
    %1464 = vmatpush1.msra.mxu0 0.0
    %1465 = vmatprep.subr.mxu0 0.0
    %1466 = vmatpush1.msra.mxu0 0.0
    %1467 = vmatprep.subr.mxu0 0.0
    %1468 = vmatpush1.msra.mxu0 0.0
    %1469 = vmatprep.subr.mxu0 0.0
    %1470 = vmatpush1.msra.mxu0 0.0
    %1471 = vmatprep.subr.mxu0 0.0
    %1472 = vmatpush1.msra.mxu0 0.0
    %1473 = vmatprep.subr.mxu0 0.0
    %1474 = vmatpush1.msra.mxu0 0.0
    %1475 = vmatprep.subr.mxu0 0.0
    %1476 = vmatpush1.msra.mxu0 0.0
    %1477 = vmatprep.subr.mxu0 0.0
    %1478 = vmatpush1.msra.mxu0 0.0
    %1479 = vmatprep.subr.mxu0 0.0
    %1480 = vmatpush1.msra.mxu0 0.0
    %1481 = vmatprep.mubr.f32.mxu0 0.0
    %1482 = vmatmul.mubr.f32.gmra.mrb[0].mxu0 %v33
    %v1483 = vpop.f32.mrb[0].mxu0
    %v1484 = vadd.f32 0.0, %v1483
    %v1485 = vpop.f32.mrb[0].mxu0
    %1486 = vmatprep.mubr.f32.mxu0 0.0
    %1487 = vmatmul.mubr.f32.gmra.mrb[0].mxu0 %v36
    %v1488 = vpop.f32.mrb[0].mxu0
    %v1489 = vadd.f32 0.0, %v1488
    %v1490 = vpop.f32.mrb[0].mxu0
    %1491 = vmatprep.mubr.f32.mxu0 0.0
    %1492 = vmatmul.mubr.f32.gmra.mrb[0].mxu0 %v39
    %v1493 = vpop.f32.mrb[0].mxu0
    %v1494 = vadd.f32 0.0, %v1493
    %v1495 = vpop.f32.mrb[0].mxu0
    %1496 = vmatprep.mubr.f32.mxu0 0.0
    %1497 = vmatmul.mubr.f32.gmra.mrb[0].mxu0 %v42
    %v1498 = vpop.f32.mrb[0].mxu0
    %v1499 = vadd.f32 0.0, %v1498
    %v1500 = vpop.f32.mrb[0].mxu0
    %1501 = vmatprep.mubr.f32.mxu0 0.0
    %1502 = vmatmul.mubr.f32.gmra.mrb[0].mxu0 %v45
    %v1503 = vpop.f32.mrb[0].mxu0
    %v1504 = vadd.f32 0.0, %v1503
    %v1505 = vpop.f32.mrb[0].mxu0
    %1506 = vmatprep.mubr.f32.mxu0 0.0
    %1507 = vmatmul.mubr.f32.gmra.mrb[0].mxu0 %v48
    %v1508 = vpop.f32.mrb[0].mxu0
    %v1509 = vadd.f32 0.0, %v1508
    %v1510 = vpop.f32.mrb[0].mxu0
    %1511 = vmatprep.mubr.f32.mxu0 0.0
    %1512 = vmatmul.mubr.f32.gmra.mrb[0].mxu0 %v51
    %v1513 = vpop.f32.mrb[0].mxu0
    %v1514 = vadd.f32 0.0, %v1513
    %v1515 = vpop.f32.mrb[0].mxu0
    %1516 = vmatprep.mubr.f32.mxu0 0.0
    %1517 = vmatmul.mubr.f32.gmra.mrb[0].mxu0 %v54
    %v1518 = vpop.f32.mrb[0].mxu0
    %v1519 = vadd.f32 0.0, %v1518
    %v1520 = vpop.f32.mrb[0].mxu0
    %1521 = vdwg.mxu0
    %v1522 = vmax.f32 %v1484, 0.0
    %v1523 = vmax.f32 %v1489, 0.0
    %v1524 = vmax.f32 %v1494, 0.0
    %v1525 = vmax.f32 %v1499, 0.0
    %v1526 = vmax.f32 %v1504, 0.0
    %v1527 = vmax.f32 %v1509, 0.0
    %v1528 = vmax.f32 %v1514, 0.0
    %v1529 = vmax.f32 %v1519, 0.0
    %v1530 = vld [vmem:[%s0 + $0x5] sm:$0xff]
    %v1531 = vld [vmem:[%s0 + $0x15] sm:$0xff]
    %v1533 = vsel %vm299, %v1530, 0
    %1535 = vmatprep.subr.mxu0 0.0
    %1536 = vmatpush1.msra.mxu0 %v1522
    %1537 = vmatprep.subr.mxu0 0.0
    %1538 = vmatpush1.msra.mxu0 %v1523
    %1539 = vmatprep.subr.mxu0 0.0
    %1540 = vmatpush1.msra.mxu0 %v1524
    %1541 = vmatprep.subr.mxu0 0.0
    %1542 = vmatpush1.msra.mxu0 %v1525
    %1543 = vmatprep.subr.mxu0 0.0
    %1544 = vmatpush1.msra.mxu0 0.0
    %1545 = vmatprep.subr.mxu0 0.0
    %1546 = vmatpush1.msra.mxu0 0.0
    %1547 = vmatprep.subr.mxu0 0.0
    %1548 = vmatpush1.msra.mxu0 0.0
    %1549 = vmatprep.subr.mxu0 0.0
    %1550 = vmatpush1.msra.mxu0 0.0
    %1551 = vmatprep.subr.mxu0 0.0
    %1552 = vmatpush1.msra.mxu0 0.0
    %1553 = vmatprep.subr.mxu0 0.0
    %1554 = vmatpush1.msra.mxu0 0.0
    %1555 = vmatprep.subr.mxu0 0.0
    %1556 = vmatpush1.msra.mxu0 0.0
    %1557 = vmatprep.subr.mxu0 0.0
    %1558 = vmatpush1.msra.mxu0 0.0
    %1559 = vmatprep.subr.mxu0 0.0
    %1560 = vmatpush1.msra.mxu0 0.0
    %1561 = vmatprep.subr.mxu0 0.0
    %1562 = vmatpush1.msra.mxu0 0.0
    %1563 = vmatprep.subr.mxu0 0.0
    %1564 = vmatpush1.msra.mxu0 0.0
    %1565 = vmatprep.subr.mxu0 0.0
    %1566 = vmatpush1.msra.mxu0 0.0
    %1567 = vmatprep.subr.mxu0 0.0
    %1568 = vmatpush1.msra.mxu0 0.0
    %1569 = vmatprep.subr.mxu0 0.0
    %1570 = vmatpush1.msra.mxu0 0.0
    %1571 = vmatprep.subr.mxu0 0.0
    %1572 = vmatpush1.msra.mxu0 0.0
    %1573 = vmatprep.subr.mxu0 0.0
    %1574 = vmatpush1.msra.mxu0 0.0
    %1575 = vmatprep.subr.mxu0 0.0
    %1576 = vmatpush1.msra.mxu0 0.0
    %1577 = vmatprep.subr.mxu0 0.0
    %1578 = vmatpush1.msra.mxu0 0.0
    %1579 = vmatprep.subr.mxu0 0.0
    %1580 = vmatpush1.msra.mxu0 0.0
    %1581 = vmatprep.subr.mxu0 0.0
    %1582 = vmatpush1.msra.mxu0 0.0
    %1583 = vmatprep.subr.mxu0 0.0
    %1584 = vmatpush1.msra.mxu0 0.0
    %1585 = vmatprep.subr.mxu0 0.0
    %1586 = vmatpush1.msra.mxu0 0.0
    %1587 = vmatprep.subr.mxu0 0.0
    %1588 = vmatpush1.msra.mxu0 0.0
    %1589 = vmatprep.subr.mxu0 0.0
    %1590 = vmatpush1.msra.mxu0 0.0
    %1591 = vmatprep.subr.mxu0 0.0
    %1592 = vmatpush1.msra.mxu0 0.0
    %1593 = vmatprep.subr.mxu0 0.0
    %1594 = vmatpush1.msra.mxu0 0.0
    %1595 = vmatprep.subr.mxu0 0.0
    %1596 = vmatpush1.msra.mxu0 0.0
    %1597 = vmatprep.subr.mxu0 0.0
    %1598 = vmatpush1.msra.mxu0 0.0
    %1599 = vmatprep.mubr.f32.mxu0 0.0
    %1600 = vmatmul.mubr.f32.gmra.mrb[0].mxu0 %v1533
    %v1601 = vpop.f32.mrb[0].mxu0
    %v1602 = vadd.f32 0.0, %v1601
    %v1603 = vpop.f32.mrb[0].mxu0
    %1604 = vdwg.mxu0
    %v1606 = vsel %vm299, %v1531, 0
    %1608 = vmatprep.subr.mxu0 0.0
    %1609 = vmatpush1.msra.mxu0 %v1526
    %1610 = vmatprep.subr.mxu0 0.0
    %1611 = vmatpush1.msra.mxu0 %v1527
    %1612 = vmatprep.subr.mxu0 0.0
    %1613 = vmatpush1.msra.mxu0 %v1528
    %1614 = vmatprep.subr.mxu0 0.0
    %1615 = vmatpush1.msra.mxu0 %v1529
    %1616 = vmatprep.subr.mxu0 0.0
    %1617 = vmatpush1.msra.mxu0 0.0
    %1618 = vmatprep.subr.mxu0 0.0
    %1619 = vmatpush1.msra.mxu0 0.0
    %1620 = vmatprep.subr.mxu0 0.0
    %1621 = vmatpush1.msra.mxu0 0.0
    %1622 = vmatprep.subr.mxu0 0.0
    %1623 = vmatpush1.msra.mxu0 0.0
    %1624 = vmatprep.subr.mxu0 0.0
    %1625 = vmatpush1.msra.mxu0 0.0
    %1626 = vmatprep.subr.mxu0 0.0
    %1627 = vmatpush1.msra.mxu0 0.0
    %1628 = vmatprep.subr.mxu0 0.0
    %1629 = vmatpush1.msra.mxu0 0.0
    %1630 = vmatprep.subr.mxu0 0.0
    %1631 = vmatpush1.msra.mxu0 0.0
    %1632 = vmatprep.subr.mxu0 0.0
    %1633 = vmatpush1.msra.mxu0 0.0
    %1634 = vmatprep.subr.mxu0 0.0
    %1635 = vmatpush1.msra.mxu0 0.0
    %1636 = vmatprep.subr.mxu0 0.0
    %1637 = vmatpush1.msra.mxu0 0.0
    %1638 = vmatprep.subr.mxu0 0.0
    %1639 = vmatpush1.msra.mxu0 0.0
    %1640 = vmatprep.subr.mxu0 0.0
    %1641 = vmatpush1.msra.mxu0 0.0
    %1642 = vmatprep.subr.mxu0 0.0
    %1643 = vmatpush1.msra.mxu0 0.0
    %1644 = vmatprep.subr.mxu0 0.0
    %1645 = vmatpush1.msra.mxu0 0.0
    %1646 = vmatprep.subr.mxu0 0.0
    %1647 = vmatpush1.msra.mxu0 0.0
    %1648 = vmatprep.subr.mxu0 0.0
    %1649 = vmatpush1.msra.mxu0 0.0
    %1650 = vmatprep.subr.mxu0 0.0
    %1651 = vmatpush1.msra.mxu0 0.0
    %1652 = vmatprep.subr.mxu0 0.0
    %1653 = vmatpush1.msra.mxu0 0.0
    %1654 = vmatprep.subr.mxu0 0.0
    %1655 = vmatpush1.msra.mxu0 0.0
    %1656 = vmatprep.subr.mxu0 0.0
    %1657 = vmatpush1.msra.mxu0 0.0
    %1658 = vmatprep.subr.mxu0 0.0
    %1659 = vmatpush1.msra.mxu0 0.0
    %1660 = vmatprep.subr.mxu0 0.0
    %1661 = vmatpush1.msra.mxu0 0.0
    %1662 = vmatprep.subr.mxu0 0.0
    %1663 = vmatpush1.msra.mxu0 0.0
    %1664 = vmatprep.subr.mxu0 0.0
    %1665 = vmatpush1.msra.mxu0 0.0
    %1666 = vmatprep.subr.mxu0 0.0
    %1667 = vmatpush1.msra.mxu0 0.0
    %1668 = vmatprep.subr.mxu0 0.0
    %1669 = vmatpush1.msra.mxu0 0.0
    %1670 = vmatprep.subr.mxu0 0.0
    %1671 = vmatpush1.msra.mxu0 0.0
    %1672 = vmatprep.mubr.f32.mxu0 0.0
    %1673 = vmatmul.mubr.f32.gmra.mrb[0].mxu0 %v1606
    %v1674 = vpop.f32.mrb[0].mxu0
    %v1675 = vadd.f32 0.0, %v1674
    %v1676 = vpop.f32.mrb[0].mxu0
    %1677 = vdwg.mxu0
    %v1678 = vadd.f32 %v1406, %v1602
    %v1679 = vadd.f32 %v1407, %v1675
    %s1680 = scalar_lea.vmem %s2, 240
    %v1681 = vld [vmem:[%s1680] sm:$0xff]
    %v1682 = vld [vmem:[%s1680 + $0x8] sm:$0xff]
    %v1683 = vld [vmem:[%s1680 + $0x10] sm:$0xff]
    %v1684 = vld [vmem:[%s1680 + $0x18] sm:$0xff]
    %v1685 = vld [vmem:[%s1680 + $0x20] sm:$0x3]
    %v1687 = vsel %vm56, %v1685, 0
    %1689 = vmatprep.subr.mxu0 0.0
    %1690 = vmatpush1.msra.mxu0 %v1681
    %1691 = vmatprep.subr.mxu0 0.0
    %1692 = vmatpush1.msra.mxu0 %v1682
    %1693 = vmatprep.subr.mxu0 0.0
    %1694 = vmatpush1.msra.mxu0 %v1683
    %1695 = vmatprep.subr.mxu0 0.0
    %1696 = vmatpush1.msra.mxu0 %v1684
    %1697 = vmatprep.subr.mxu0 0.0
    %1698 = vmatpush1.msra.mxu0 %v1687
    %1699 = vmatprep.subr.mxu0 0.0
    %1700 = vmatpush1.msra.mxu0 0.0
    %1701 = vmatprep.subr.mxu0 0.0
    %1702 = vmatpush1.msra.mxu0 0.0
    %1703 = vmatprep.subr.mxu0 0.0
    %1704 = vmatpush1.msra.mxu0 0.0
    %1705 = vmatprep.subr.mxu0 0.0
    %1706 = vmatpush1.msra.mxu0 0.0
    %1707 = vmatprep.subr.mxu0 0.0
    %1708 = vmatpush1.msra.mxu0 0.0
    %1709 = vmatprep.subr.mxu0 0.0
    %1710 = vmatpush1.msra.mxu0 0.0
    %1711 = vmatprep.subr.mxu0 0.0
    %1712 = vmatpush1.msra.mxu0 0.0
    %1713 = vmatprep.subr.mxu0 0.0
    %1714 = vmatpush1.msra.mxu0 0.0
    %1715 = vmatprep.subr.mxu0 0.0
    %1716 = vmatpush1.msra.mxu0 0.0
    %1717 = vmatprep.subr.mxu0 0.0
    %1718 = vmatpush1.msra.mxu0 0.0
    %1719 = vmatprep.subr.mxu0 0.0
    %1720 = vmatpush1.msra.mxu0 0.0
    %1721 = vmatprep.subr.mxu0 0.0
    %1722 = vmatpush1.msra.mxu0 0.0
    %1723 = vmatprep.subr.mxu0 0.0
    %1724 = vmatpush1.msra.mxu0 0.0
    %1725 = vmatprep.subr.mxu0 0.0
    %1726 = vmatpush1.msra.mxu0 0.0
    %1727 = vmatprep.subr.mxu0 0.0
    %1728 = vmatpush1.msra.mxu0 0.0
    %1729 = vmatprep.subr.mxu0 0.0
    %1730 = vmatpush1.msra.mxu0 0.0
    %1731 = vmatprep.subr.mxu0 0.0
    %1732 = vmatpush1.msra.mxu0 0.0
    %1733 = vmatprep.subr.mxu0 0.0
    %1734 = vmatpush1.msra.mxu0 0.0
    %1735 = vmatprep.subr.mxu0 0.0
    %1736 = vmatpush1.msra.mxu0 0.0
    %1737 = vmatprep.subr.mxu0 0.0
    %1738 = vmatpush1.msra.mxu0 0.0
    %1739 = vmatprep.subr.mxu0 0.0
    %1740 = vmatpush1.msra.mxu0 0.0
    %1741 = vmatprep.subr.mxu0 0.0
    %1742 = vmatpush1.msra.mxu0 0.0
    %1743 = vmatprep.subr.mxu0 0.0
    %1744 = vmatpush1.msra.mxu0 0.0
    %1745 = vmatprep.subr.mxu0 0.0
    %1746 = vmatpush1.msra.mxu0 0.0
    %1747 = vmatprep.subr.mxu0 0.0
    %1748 = vmatpush1.msra.mxu0 0.0
    %1749 = vmatprep.subr.mxu0 0.0
    %1750 = vmatpush1.msra.mxu0 0.0
    %1751 = vmatprep.subr.mxu0 0.0
    %1752 = vmatpush1.msra.mxu0 0.0
    %1753 = vmatprep.mubr.f32.mxu0 0.0
    %1754 = vmatmul.mubr.f32.gmra.mrb[0].mxu0 %v33
    %v1755 = vpop.f32.mrb[0].mxu0
    %v1756 = vadd.f32 0.0, %v1755
    %v1757 = vpop.f32.mrb[0].mxu0
    %1758 = vmatprep.mubr.f32.mxu0 0.0
    %1759 = vmatmul.mubr.f32.gmra.mrb[0].mxu0 %v36
    %v1760 = vpop.f32.mrb[0].mxu0
    %v1761 = vadd.f32 0.0, %v1760
    %v1762 = vpop.f32.mrb[0].mxu0
    %1763 = vmatprep.mubr.f32.mxu0 0.0
    %1764 = vmatmul.mubr.f32.gmra.mrb[0].mxu0 %v39
    %v1765 = vpop.f32.mrb[0].mxu0
    %v1766 = vadd.f32 0.0, %v1765
    %v1767 = vpop.f32.mrb[0].mxu0
    %1768 = vmatprep.mubr.f32.mxu0 0.0
    %1769 = vmatmul.mubr.f32.gmra.mrb[0].mxu0 %v42
    %v1770 = vpop.f32.mrb[0].mxu0
    %v1771 = vadd.f32 0.0, %v1770
    %v1772 = vpop.f32.mrb[0].mxu0
    %1773 = vmatprep.mubr.f32.mxu0 0.0
    %1774 = vmatmul.mubr.f32.gmra.mrb[0].mxu0 %v45
    %v1775 = vpop.f32.mrb[0].mxu0
    %v1776 = vadd.f32 0.0, %v1775
    %v1777 = vpop.f32.mrb[0].mxu0
    %1778 = vmatprep.mubr.f32.mxu0 0.0
    %1779 = vmatmul.mubr.f32.gmra.mrb[0].mxu0 %v48
    %v1780 = vpop.f32.mrb[0].mxu0
    %v1781 = vadd.f32 0.0, %v1780
    %v1782 = vpop.f32.mrb[0].mxu0
    %1783 = vmatprep.mubr.f32.mxu0 0.0
    %1784 = vmatmul.mubr.f32.gmra.mrb[0].mxu0 %v51
    %v1785 = vpop.f32.mrb[0].mxu0
    %v1786 = vadd.f32 0.0, %v1785
    %v1787 = vpop.f32.mrb[0].mxu0
    %1788 = vmatprep.mubr.f32.mxu0 0.0
    %1789 = vmatmul.mubr.f32.gmra.mrb[0].mxu0 %v54
    %v1790 = vpop.f32.mrb[0].mxu0
    %v1791 = vadd.f32 0.0, %v1790
    %v1792 = vpop.f32.mrb[0].mxu0
    %1793 = vdwg.mxu0
    %v1794 = vmax.f32 %v1756, 0.0
    %v1795 = vmax.f32 %v1761, 0.0
    %v1796 = vmax.f32 %v1766, 0.0
    %v1797 = vmax.f32 %v1771, 0.0
    %v1798 = vmax.f32 %v1776, 0.0
    %v1799 = vmax.f32 %v1781, 0.0
    %v1800 = vmax.f32 %v1786, 0.0
    %v1801 = vmax.f32 %v1791, 0.0
    %v1802 = vld [vmem:[%s0 + $0x6] sm:$0xff]
    %v1803 = vld [vmem:[%s0 + $0x16] sm:$0xff]
    %v1805 = vsel %vm299, %v1802, 0
    %1807 = vmatprep.subr.mxu0 0.0
    %1808 = vmatpush1.msra.mxu0 %v1794
    %1809 = vmatprep.subr.mxu0 0.0
    %1810 = vmatpush1.msra.mxu0 %v1795
    %1811 = vmatprep.subr.mxu0 0.0
    %1812 = vmatpush1.msra.mxu0 %v1796
    %1813 = vmatprep.subr.mxu0 0.0
    %1814 = vmatpush1.msra.mxu0 %v1797
    %1815 = vmatprep.subr.mxu0 0.0
    %1816 = vmatpush1.msra.mxu0 0.0
    %1817 = vmatprep.subr.mxu0 0.0
    %1818 = vmatpush1.msra.mxu0 0.0
    %1819 = vmatprep.subr.mxu0 0.0
    %1820 = vmatpush1.msra.mxu0 0.0
    %1821 = vmatprep.subr.mxu0 0.0
    %1822 = vmatpush1.msra.mxu0 0.0
    %1823 = vmatprep.subr.mxu0 0.0
    %1824 = vmatpush1.msra.mxu0 0.0
    %1825 = vmatprep.subr.mxu0 0.0
    %1826 = vmatpush1.msra.mxu0 0.0
    %1827 = vmatprep.subr.mxu0 0.0
    %1828 = vmatpush1.msra.mxu0 0.0
    %1829 = vmatprep.subr.mxu0 0.0
    %1830 = vmatpush1.msra.mxu0 0.0
    %1831 = vmatprep.subr.mxu0 0.0
    %1832 = vmatpush1.msra.mxu0 0.0
    %1833 = vmatprep.subr.mxu0 0.0
    %1834 = vmatpush1.msra.mxu0 0.0
    %1835 = vmatprep.subr.mxu0 0.0
    %1836 = vmatpush1.msra.mxu0 0.0
    %1837 = vmatprep.subr.mxu0 0.0
    %1838 = vmatpush1.msra.mxu0 0.0
    %1839 = vmatprep.subr.mxu0 0.0
    %1840 = vmatpush1.msra.mxu0 0.0
    %1841 = vmatprep.subr.mxu0 0.0
    %1842 = vmatpush1.msra.mxu0 0.0
    %1843 = vmatprep.subr.mxu0 0.0
    %1844 = vmatpush1.msra.mxu0 0.0
    %1845 = vmatprep.subr.mxu0 0.0
    %1846 = vmatpush1.msra.mxu0 0.0
    %1847 = vmatprep.subr.mxu0 0.0
    %1848 = vmatpush1.msra.mxu0 0.0
    %1849 = vmatprep.subr.mxu0 0.0
    %1850 = vmatpush1.msra.mxu0 0.0
    %1851 = vmatprep.subr.mxu0 0.0
    %1852 = vmatpush1.msra.mxu0 0.0
    %1853 = vmatprep.subr.mxu0 0.0
    %1854 = vmatpush1.msra.mxu0 0.0
    %1855 = vmatprep.subr.mxu0 0.0
    %1856 = vmatpush1.msra.mxu0 0.0
    %1857 = vmatprep.subr.mxu0 0.0
    %1858 = vmatpush1.msra.mxu0 0.0
    %1859 = vmatprep.subr.mxu0 0.0
    %1860 = vmatpush1.msra.mxu0 0.0
    %1861 = vmatprep.subr.mxu0 0.0
    %1862 = vmatpush1.msra.mxu0 0.0
    %1863 = vmatprep.subr.mxu0 0.0
    %1864 = vmatpush1.msra.mxu0 0.0
    %1865 = vmatprep.subr.mxu0 0.0
    %1866 = vmatpush1.msra.mxu0 0.0
    %1867 = vmatprep.subr.mxu0 0.0
    %1868 = vmatpush1.msra.mxu0 0.0
    %1869 = vmatprep.subr.mxu0 0.0
    %1870 = vmatpush1.msra.mxu0 0.0
    %1871 = vmatprep.mubr.f32.mxu0 0.0
    %1872 = vmatmul.mubr.f32.gmra.mrb[0].mxu0 %v1805
    %v1873 = vpop.f32.mrb[0].mxu0
    %v1874 = vadd.f32 0.0, %v1873
    %v1875 = vpop.f32.mrb[0].mxu0
    %1876 = vdwg.mxu0
    %v1878 = vsel %vm299, %v1803, 0
    %1880 = vmatprep.subr.mxu0 0.0
    %1881 = vmatpush1.msra.mxu0 %v1798
    %1882 = vmatprep.subr.mxu0 0.0
    %1883 = vmatpush1.msra.mxu0 %v1799
    %1884 = vmatprep.subr.mxu0 0.0
    %1885 = vmatpush1.msra.mxu0 %v1800
    %1886 = vmatprep.subr.mxu0 0.0
    %1887 = vmatpush1.msra.mxu0 %v1801
    %1888 = vmatprep.subr.mxu0 0.0
    %1889 = vmatpush1.msra.mxu0 0.0
    %1890 = vmatprep.subr.mxu0 0.0
    %1891 = vmatpush1.msra.mxu0 0.0
    %1892 = vmatprep.subr.mxu0 0.0
    %1893 = vmatpush1.msra.mxu0 0.0
    %1894 = vmatprep.subr.mxu0 0.0
    %1895 = vmatpush1.msra.mxu0 0.0
    %1896 = vmatprep.subr.mxu0 0.0
    %1897 = vmatpush1.msra.mxu0 0.0
    %1898 = vmatprep.subr.mxu0 0.0
    %1899 = vmatpush1.msra.mxu0 0.0
    %1900 = vmatprep.subr.mxu0 0.0
    %1901 = vmatpush1.msra.mxu0 0.0
    %1902 = vmatprep.subr.mxu0 0.0
    %1903 = vmatpush1.msra.mxu0 0.0
    %1904 = vmatprep.subr.mxu0 0.0
    %1905 = vmatpush1.msra.mxu0 0.0
    %1906 = vmatprep.subr.mxu0 0.0
    %1907 = vmatpush1.msra.mxu0 0.0
    %1908 = vmatprep.subr.mxu0 0.0
    %1909 = vmatpush1.msra.mxu0 0.0
    %1910 = vmatprep.subr.mxu0 0.0
    %1911 = vmatpush1.msra.mxu0 0.0
    %1912 = vmatprep.subr.mxu0 0.0
    %1913 = vmatpush1.msra.mxu0 0.0
    %1914 = vmatprep.subr.mxu0 0.0
    %1915 = vmatpush1.msra.mxu0 0.0
    %1916 = vmatprep.subr.mxu0 0.0
    %1917 = vmatpush1.msra.mxu0 0.0
    %1918 = vmatprep.subr.mxu0 0.0
    %1919 = vmatpush1.msra.mxu0 0.0
    %1920 = vmatprep.subr.mxu0 0.0
    %1921 = vmatpush1.msra.mxu0 0.0
    %1922 = vmatprep.subr.mxu0 0.0
    %1923 = vmatpush1.msra.mxu0 0.0
    %1924 = vmatprep.subr.mxu0 0.0
    %1925 = vmatpush1.msra.mxu0 0.0
    %1926 = vmatprep.subr.mxu0 0.0
    %1927 = vmatpush1.msra.mxu0 0.0
    %1928 = vmatprep.subr.mxu0 0.0
    %1929 = vmatpush1.msra.mxu0 0.0
    %1930 = vmatprep.subr.mxu0 0.0
    %1931 = vmatpush1.msra.mxu0 0.0
    %1932 = vmatprep.subr.mxu0 0.0
    %1933 = vmatpush1.msra.mxu0 0.0
    %1934 = vmatprep.subr.mxu0 0.0
    %1935 = vmatpush1.msra.mxu0 0.0
    %1936 = vmatprep.subr.mxu0 0.0
    %1937 = vmatpush1.msra.mxu0 0.0
    %1938 = vmatprep.subr.mxu0 0.0
    %1939 = vmatpush1.msra.mxu0 0.0
    %1940 = vmatprep.subr.mxu0 0.0
    %1941 = vmatpush1.msra.mxu0 0.0
    %1942 = vmatprep.subr.mxu0 0.0
    %1943 = vmatpush1.msra.mxu0 0.0
    %1944 = vmatprep.mubr.f32.mxu0 0.0
    %1945 = vmatmul.mubr.f32.gmra.mrb[0].mxu0 %v1878
    %v1946 = vpop.f32.mrb[0].mxu0
    %v1947 = vadd.f32 0.0, %v1946
    %v1948 = vpop.f32.mrb[0].mxu0
    %1949 = vdwg.mxu0
    %v1950 = vadd.f32 %v1678, %v1874
    %v1951 = vadd.f32 %v1679, %v1947
    %s1952 = scalar_lea.vmem %s2, 280
    %v1953 = vld [vmem:[%s1952] sm:$0xff]
    %v1954 = vld [vmem:[%s1952 + $0x8] sm:$0xff]
    %v1955 = vld [vmem:[%s1952 + $0x10] sm:$0xff]
    %v1956 = vld [vmem:[%s1952 + $0x18] sm:$0xff]
    %v1957 = vld [vmem:[%s1952 + $0x20] sm:$0x3]
    %v1959 = vsel %vm56, %v1957, 0
    %1961 = vmatprep.subr.mxu0 0.0
    %1962 = vmatpush1.msra.mxu0 %v1953
    %1963 = vmatprep.subr.mxu0 0.0
    %1964 = vmatpush1.msra.mxu0 %v1954
    %1965 = vmatprep.subr.mxu0 0.0
    %1966 = vmatpush1.msra.mxu0 %v1955
    %1967 = vmatprep.subr.mxu0 0.0
    %1968 = vmatpush1.msra.mxu0 %v1956
    %1969 = vmatprep.subr.mxu0 0.0
    %1970 = vmatpush1.msra.mxu0 %v1959
    %1971 = vmatprep.subr.mxu0 0.0
    %1972 = vmatpush1.msra.mxu0 0.0
    %1973 = vmatprep.subr.mxu0 0.0
    %1974 = vmatpush1.msra.mxu0 0.0
    %1975 = vmatprep.subr.mxu0 0.0
    %1976 = vmatpush1.msra.mxu0 0.0
    %1977 = vmatprep.subr.mxu0 0.0
    %1978 = vmatpush1.msra.mxu0 0.0
    %1979 = vmatprep.subr.mxu0 0.0
    %1980 = vmatpush1.msra.mxu0 0.0
    %1981 = vmatprep.subr.mxu0 0.0
    %1982 = vmatpush1.msra.mxu0 0.0
    %1983 = vmatprep.subr.mxu0 0.0
    %1984 = vmatpush1.msra.mxu0 0.0
    %1985 = vmatprep.subr.mxu0 0.0
    %1986 = vmatpush1.msra.mxu0 0.0
    %1987 = vmatprep.subr.mxu0 0.0
    %1988 = vmatpush1.msra.mxu0 0.0
    %1989 = vmatprep.subr.mxu0 0.0
    %1990 = vmatpush1.msra.mxu0 0.0
    %1991 = vmatprep.subr.mxu0 0.0
    %1992 = vmatpush1.msra.mxu0 0.0
    %1993 = vmatprep.subr.mxu0 0.0
    %1994 = vmatpush1.msra.mxu0 0.0
    %1995 = vmatprep.subr.mxu0 0.0
    %1996 = vmatpush1.msra.mxu0 0.0
    %1997 = vmatprep.subr.mxu0 0.0
    %1998 = vmatpush1.msra.mxu0 0.0
    %1999 = vmatprep.subr.mxu0 0.0
    %2000 = vmatpush1.msra.mxu0 0.0
    %2001 = vmatprep.subr.mxu0 0.0
    %2002 = vmatpush1.msra.mxu0 0.0
    %2003 = vmatprep.subr.mxu0 0.0
    %2004 = vmatpush1.msra.mxu0 0.0
    %2005 = vmatprep.subr.mxu0 0.0
    %2006 = vmatpush1.msra.mxu0 0.0
    %2007 = vmatprep.subr.mxu0 0.0
    %2008 = vmatpush1.msra.mxu0 0.0
    %2009 = vmatprep.subr.mxu0 0.0
    %2010 = vmatpush1.msra.mxu0 0.0
    %2011 = vmatprep.subr.mxu0 0.0
    %2012 = vmatpush1.msra.mxu0 0.0
    %2013 = vmatprep.subr.mxu0 0.0
    %2014 = vmatpush1.msra.mxu0 0.0
    %2015 = vmatprep.subr.mxu0 0.0
    %2016 = vmatpush1.msra.mxu0 0.0
    %2017 = vmatprep.subr.mxu0 0.0
    %2018 = vmatpush1.msra.mxu0 0.0
    %2019 = vmatprep.subr.mxu0 0.0
    %2020 = vmatpush1.msra.mxu0 0.0
    %2021 = vmatprep.subr.mxu0 0.0
    %2022 = vmatpush1.msra.mxu0 0.0
    %2023 = vmatprep.subr.mxu0 0.0
    %2024 = vmatpush1.msra.mxu0 0.0
    %2025 = vmatprep.mubr.f32.mxu0 0.0
    %2026 = vmatmul.mubr.f32.gmra.mrb[0].mxu0 %v33
    %v2027 = vpop.f32.mrb[0].mxu0
    %v2028 = vadd.f32 0.0, %v2027
    %v2029 = vpop.f32.mrb[0].mxu0
    %2030 = vmatprep.mubr.f32.mxu0 0.0
    %2031 = vmatmul.mubr.f32.gmra.mrb[0].mxu0 %v36
    %v2032 = vpop.f32.mrb[0].mxu0
    %v2033 = vadd.f32 0.0, %v2032
    %v2034 = vpop.f32.mrb[0].mxu0
    %2035 = vmatprep.mubr.f32.mxu0 0.0
    %2036 = vmatmul.mubr.f32.gmra.mrb[0].mxu0 %v39
    %v2037 = vpop.f32.mrb[0].mxu0
    %v2038 = vadd.f32 0.0, %v2037
    %v2039 = vpop.f32.mrb[0].mxu0
    %2040 = vmatprep.mubr.f32.mxu0 0.0
    %2041 = vmatmul.mubr.f32.gmra.mrb[0].mxu0 %v42
    %v2042 = vpop.f32.mrb[0].mxu0
    %v2043 = vadd.f32 0.0, %v2042
    %v2044 = vpop.f32.mrb[0].mxu0
    %2045 = vmatprep.mubr.f32.mxu0 0.0
    %2046 = vmatmul.mubr.f32.gmra.mrb[0].mxu0 %v45
    %v2047 = vpop.f32.mrb[0].mxu0
    %v2048 = vadd.f32 0.0, %v2047
    %v2049 = vpop.f32.mrb[0].mxu0
    %2050 = vmatprep.mubr.f32.mxu0 0.0
    %2051 = vmatmul.mubr.f32.gmra.mrb[0].mxu0 %v48
    %v2052 = vpop.f32.mrb[0].mxu0
    %v2053 = vadd.f32 0.0, %v2052
    %v2054 = vpop.f32.mrb[0].mxu0
    %2055 = vmatprep.mubr.f32.mxu0 0.0
    %2056 = vmatmul.mubr.f32.gmra.mrb[0].mxu0 %v51
    %v2057 = vpop.f32.mrb[0].mxu0
    %v2058 = vadd.f32 0.0, %v2057
    %v2059 = vpop.f32.mrb[0].mxu0
    %2060 = vmatprep.mubr.f32.mxu0 0.0
    %2061 = vmatmul.mubr.f32.gmra.mrb[0].mxu0 %v54
    %v2062 = vpop.f32.mrb[0].mxu0
    %v2063 = vadd.f32 0.0, %v2062
    %v2064 = vpop.f32.mrb[0].mxu0
    %2065 = vdwg.mxu0
    %v2066 = vmax.f32 %v2028, 0.0
    %v2067 = vmax.f32 %v2033, 0.0
    %v2068 = vmax.f32 %v2038, 0.0
    %v2069 = vmax.f32 %v2043, 0.0
    %v2070 = vmax.f32 %v2048, 0.0
    %v2071 = vmax.f32 %v2053, 0.0
    %v2072 = vmax.f32 %v2058, 0.0
    %v2073 = vmax.f32 %v2063, 0.0
    %v2074 = vld [vmem:[%s0 + $0x7] sm:$0xff]
    %v2075 = vld [vmem:[%s0 + $0x17] sm:$0xff]
    %v2077 = vsel %vm299, %v2074, 0
    %2079 = vmatprep.subr.mxu0 0.0
    %2080 = vmatpush1.msra.mxu0 %v2066
    %2081 = vmatprep.subr.mxu0 0.0
    %2082 = vmatpush1.msra.mxu0 %v2067
    %2083 = vmatprep.subr.mxu0 0.0
    %2084 = vmatpush1.msra.mxu0 %v2068
    %2085 = vmatprep.subr.mxu0 0.0
    %2086 = vmatpush1.msra.mxu0 %v2069
    %2087 = vmatprep.subr.mxu0 0.0
    %2088 = vmatpush1.msra.mxu0 0.0
    %2089 = vmatprep.subr.mxu0 0.0
    %2090 = vmatpush1.msra.mxu0 0.0
    %2091 = vmatprep.subr.mxu0 0.0
    %2092 = vmatpush1.msra.mxu0 0.0
    %2093 = vmatprep.subr.mxu0 0.0
    %2094 = vmatpush1.msra.mxu0 0.0
    %2095 = vmatprep.subr.mxu0 0.0
    %2096 = vmatpush1.msra.mxu0 0.0
    %2097 = vmatprep.subr.mxu0 0.0
    %2098 = vmatpush1.msra.mxu0 0.0
    %2099 = vmatprep.subr.mxu0 0.0
    %2100 = vmatpush1.msra.mxu0 0.0
    %2101 = vmatprep.subr.mxu0 0.0
    %2102 = vmatpush1.msra.mxu0 0.0
    %2103 = vmatprep.subr.mxu0 0.0
    %2104 = vmatpush1.msra.mxu0 0.0
    %2105 = vmatprep.subr.mxu0 0.0
    %2106 = vmatpush1.msra.mxu0 0.0
    %2107 = vmatprep.subr.mxu0 0.0
    %2108 = vmatpush1.msra.mxu0 0.0
    %2109 = vmatprep.subr.mxu0 0.0
    %2110 = vmatpush1.msra.mxu0 0.0
    %2111 = vmatprep.subr.mxu0 0.0
    %2112 = vmatpush1.msra.mxu0 0.0
    %2113 = vmatprep.subr.mxu0 0.0
    %2114 = vmatpush1.msra.mxu0 0.0
    %2115 = vmatprep.subr.mxu0 0.0
    %2116 = vmatpush1.msra.mxu0 0.0
    %2117 = vmatprep.subr.mxu0 0.0
    %2118 = vmatpush1.msra.mxu0 0.0
    %2119 = vmatprep.subr.mxu0 0.0
    %2120 = vmatpush1.msra.mxu0 0.0
    %2121 = vmatprep.subr.mxu0 0.0
    %2122 = vmatpush1.msra.mxu0 0.0
    %2123 = vmatprep.subr.mxu0 0.0
    %2124 = vmatpush1.msra.mxu0 0.0
    %2125 = vmatprep.subr.mxu0 0.0
    %2126 = vmatpush1.msra.mxu0 0.0
    %2127 = vmatprep.subr.mxu0 0.0
    %2128 = vmatpush1.msra.mxu0 0.0
    %2129 = vmatprep.subr.mxu0 0.0
    %2130 = vmatpush1.msra.mxu0 0.0
    %2131 = vmatprep.subr.mxu0 0.0
    %2132 = vmatpush1.msra.mxu0 0.0
    %2133 = vmatprep.subr.mxu0 0.0
    %2134 = vmatpush1.msra.mxu0 0.0
    %2135 = vmatprep.subr.mxu0 0.0
    %2136 = vmatpush1.msra.mxu0 0.0
    %2137 = vmatprep.subr.mxu0 0.0
    %2138 = vmatpush1.msra.mxu0 0.0
    %2139 = vmatprep.subr.mxu0 0.0
    %2140 = vmatpush1.msra.mxu0 0.0
    %2141 = vmatprep.subr.mxu0 0.0
    %2142 = vmatpush1.msra.mxu0 0.0
    %2143 = vmatprep.mubr.f32.mxu0 0.0
    %2144 = vmatmul.mubr.f32.gmra.mrb[0].mxu0 %v2077
    %v2145 = vpop.f32.mrb[0].mxu0
    %v2146 = vadd.f32 0.0, %v2145
    %v2147 = vpop.f32.mrb[0].mxu0
    %2148 = vdwg.mxu0
    %v2150 = vsel %vm299, %v2075, 0
    %2152 = vmatprep.subr.mxu0 0.0
    %2153 = vmatpush1.msra.mxu0 %v2070
    %2154 = vmatprep.subr.mxu0 0.0
    %2155 = vmatpush1.msra.mxu0 %v2071
    %2156 = vmatprep.subr.mxu0 0.0
    %2157 = vmatpush1.msra.mxu0 %v2072
    %2158 = vmatprep.subr.mxu0 0.0
    %2159 = vmatpush1.msra.mxu0 %v2073
    %2160 = vmatprep.subr.mxu0 0.0
    %2161 = vmatpush1.msra.mxu0 0.0
    %2162 = vmatprep.subr.mxu0 0.0
    %2163 = vmatpush1.msra.mxu0 0.0
    %2164 = vmatprep.subr.mxu0 0.0
    %2165 = vmatpush1.msra.mxu0 0.0
    %2166 = vmatprep.subr.mxu0 0.0
    %2167 = vmatpush1.msra.mxu0 0.0
    %2168 = vmatprep.subr.mxu0 0.0
    %2169 = vmatpush1.msra.mxu0 0.0
    %2170 = vmatprep.subr.mxu0 0.0
    %2171 = vmatpush1.msra.mxu0 0.0
    %2172 = vmatprep.subr.mxu0 0.0
    %2173 = vmatpush1.msra.mxu0 0.0
    %2174 = vmatprep.subr.mxu0 0.0
    %2175 = vmatpush1.msra.mxu0 0.0
    %2176 = vmatprep.subr.mxu0 0.0
    %2177 = vmatpush1.msra.mxu0 0.0
    %2178 = vmatprep.subr.mxu0 0.0
    %2179 = vmatpush1.msra.mxu0 0.0
    %2180 = vmatprep.subr.mxu0 0.0
    %2181 = vmatpush1.msra.mxu0 0.0
    %2182 = vmatprep.subr.mxu0 0.0
    %2183 = vmatpush1.msra.mxu0 0.0
    %2184 = vmatprep.subr.mxu0 0.0
    %2185 = vmatpush1.msra.mxu0 0.0
    %2186 = vmatprep.subr.mxu0 0.0
    %2187 = vmatpush1.msra.mxu0 0.0
    %2188 = vmatprep.subr.mxu0 0.0
    %2189 = vmatpush1.msra.mxu0 0.0
    %2190 = vmatprep.subr.mxu0 0.0
    %2191 = vmatpush1.msra.mxu0 0.0
    %2192 = vmatprep.subr.mxu0 0.0
    %2193 = vmatpush1.msra.mxu0 0.0
    %2194 = vmatprep.subr.mxu0 0.0
    %2195 = vmatpush1.msra.mxu0 0.0
    %2196 = vmatprep.subr.mxu0 0.0
    %2197 = vmatpush1.msra.mxu0 0.0
    %2198 = vmatprep.subr.mxu0 0.0
    %2199 = vmatpush1.msra.mxu0 0.0
    %2200 = vmatprep.subr.mxu0 0.0
    %2201 = vmatpush1.msra.mxu0 0.0
    %2202 = vmatprep.subr.mxu0 0.0
    %2203 = vmatpush1.msra.mxu0 0.0
    %2204 = vmatprep.subr.mxu0 0.0
    %2205 = vmatpush1.msra.mxu0 0.0
    %2206 = vmatprep.subr.mxu0 0.0
    %2207 = vmatpush1.msra.mxu0 0.0
    %2208 = vmatprep.subr.mxu0 0.0
    %2209 = vmatpush1.msra.mxu0 0.0
    %2210 = vmatprep.subr.mxu0 0.0
    %2211 = vmatpush1.msra.mxu0 0.0
    %2212 = vmatprep.subr.mxu0 0.0
    %2213 = vmatpush1.msra.mxu0 0.0
    %2214 = vmatprep.subr.mxu0 0.0
    %2215 = vmatpush1.msra.mxu0 0.0
    %2216 = vmatprep.mubr.f32.mxu0 0.0
    %2217 = vmatmul.mubr.f32.gmra.mrb[0].mxu0 %v2150
    %v2218 = vpop.f32.mrb[0].mxu0
    %v2219 = vadd.f32 0.0, %v2218
    %v2220 = vpop.f32.mrb[0].mxu0
    %2221 = vdwg.mxu0
    %v2222 = vadd.f32 %v1950, %v2146
    %v2223 = vadd.f32 %v1951, %v2219
    %s2224 = scalar_lea.vmem %s2, 320
    %v2225 = vld [vmem:[%s2224] sm:$0xff]
    %v2226 = vld [vmem:[%s2224 + $0x8] sm:$0xff]
    %v2227 = vld [vmem:[%s2224 + $0x10] sm:$0xff]
    %v2228 = vld [vmem:[%s2224 + $0x18] sm:$0xff]
    %v2229 = vld [vmem:[%s2224 + $0x20] sm:$0x3]
    %v2231 = vsel %vm56, %v2229, 0
    %2233 = vmatprep.subr.mxu0 0.0
    %2234 = vmatpush1.msra.mxu0 %v2225
    %2235 = vmatprep.subr.mxu0 0.0
    %2236 = vmatpush1.msra.mxu0 %v2226
    %2237 = vmatprep.subr.mxu0 0.0
    %2238 = vmatpush1.msra.mxu0 %v2227
    %2239 = vmatprep.subr.mxu0 0.0
    %2240 = vmatpush1.msra.mxu0 %v2228
    %2241 = vmatprep.subr.mxu0 0.0
    %2242 = vmatpush1.msra.mxu0 %v2231
    %2243 = vmatprep.subr.mxu0 0.0
    %2244 = vmatpush1.msra.mxu0 0.0
    %2245 = vmatprep.subr.mxu0 0.0
    %2246 = vmatpush1.msra.mxu0 0.0
    %2247 = vmatprep.subr.mxu0 0.0
    %2248 = vmatpush1.msra.mxu0 0.0
    %2249 = vmatprep.subr.mxu0 0.0
    %2250 = vmatpush1.msra.mxu0 0.0
    %2251 = vmatprep.subr.mxu0 0.0
    %2252 = vmatpush1.msra.mxu0 0.0
    %2253 = vmatprep.subr.mxu0 0.0
    %2254 = vmatpush1.msra.mxu0 0.0
    %2255 = vmatprep.subr.mxu0 0.0
    %2256 = vmatpush1.msra.mxu0 0.0
    %2257 = vmatprep.subr.mxu0 0.0
    %2258 = vmatpush1.msra.mxu0 0.0
    %2259 = vmatprep.subr.mxu0 0.0
    %2260 = vmatpush1.msra.mxu0 0.0
    %2261 = vmatprep.subr.mxu0 0.0
    %2262 = vmatpush1.msra.mxu0 0.0
    %2263 = vmatprep.subr.mxu0 0.0
    %2264 = vmatpush1.msra.mxu0 0.0
    %2265 = vmatprep.subr.mxu0 0.0
    %2266 = vmatpush1.msra.mxu0 0.0
    %2267 = vmatprep.subr.mxu0 0.0
    %2268 = vmatpush1.msra.mxu0 0.0
    %2269 = vmatprep.subr.mxu0 0.0
    %2270 = vmatpush1.msra.mxu0 0.0
    %2271 = vmatprep.subr.mxu0 0.0
    %2272 = vmatpush1.msra.mxu0 0.0
    %2273 = vmatprep.subr.mxu0 0.0
    %2274 = vmatpush1.msra.mxu0 0.0
    %2275 = vmatprep.subr.mxu0 0.0
    %2276 = vmatpush1.msra.mxu0 0.0
    %2277 = vmatprep.subr.mxu0 0.0
    %2278 = vmatpush1.msra.mxu0 0.0
    %2279 = vmatprep.subr.mxu0 0.0
    %2280 = vmatpush1.msra.mxu0 0.0
    %2281 = vmatprep.subr.mxu0 0.0
    %2282 = vmatpush1.msra.mxu0 0.0
    %2283 = vmatprep.subr.mxu0 0.0
    %2284 = vmatpush1.msra.mxu0 0.0
    %2285 = vmatprep.subr.mxu0 0.0
    %2286 = vmatpush1.msra.mxu0 0.0
    %2287 = vmatprep.subr.mxu0 0.0
    %2288 = vmatpush1.msra.mxu0 0.0
    %2289 = vmatprep.subr.mxu0 0.0
    %2290 = vmatpush1.msra.mxu0 0.0
    %2291 = vmatprep.subr.mxu0 0.0
    %2292 = vmatpush1.msra.mxu0 0.0
    %2293 = vmatprep.subr.mxu0 0.0
    %2294 = vmatpush1.msra.mxu0 0.0
    %2295 = vmatprep.subr.mxu0 0.0
    %2296 = vmatpush1.msra.mxu0 0.0
    %2297 = vmatprep.mubr.f32.mxu0 0.0
    %2298 = vmatmul.mubr.f32.gmra.mrb[0].mxu0 %v33
    %v2299 = vpop.f32.mrb[0].mxu0
    %v2300 = vadd.f32 0.0, %v2299
    %v2301 = vpop.f32.mrb[0].mxu0
    %2302 = vmatprep.mubr.f32.mxu0 0.0
    %2303 = vmatmul.mubr.f32.gmra.mrb[0].mxu0 %v36
    %v2304 = vpop.f32.mrb[0].mxu0
    %v2305 = vadd.f32 0.0, %v2304
    %v2306 = vpop.f32.mrb[0].mxu0
    %2307 = vmatprep.mubr.f32.mxu0 0.0
    %2308 = vmatmul.mubr.f32.gmra.mrb[0].mxu0 %v39
    %v2309 = vpop.f32.mrb[0].mxu0
    %v2310 = vadd.f32 0.0, %v2309
    %v2311 = vpop.f32.mrb[0].mxu0
    %2312 = vmatprep.mubr.f32.mxu0 0.0
    %2313 = vmatmul.mubr.f32.gmra.mrb[0].mxu0 %v42
    %v2314 = vpop.f32.mrb[0].mxu0
    %v2315 = vadd.f32 0.0, %v2314
    %v2316 = vpop.f32.mrb[0].mxu0
    %2317 = vmatprep.mubr.f32.mxu0 0.0
    %2318 = vmatmul.mubr.f32.gmra.mrb[0].mxu0 %v45
    %v2319 = vpop.f32.mrb[0].mxu0
    %v2320 = vadd.f32 0.0, %v2319
    %v2321 = vpop.f32.mrb[0].mxu0
    %2322 = vmatprep.mubr.f32.mxu0 0.0
    %2323 = vmatmul.mubr.f32.gmra.mrb[0].mxu0 %v48
    %v2324 = vpop.f32.mrb[0].mxu0
    %v2325 = vadd.f32 0.0, %v2324
    %v2326 = vpop.f32.mrb[0].mxu0
    %2327 = vmatprep.mubr.f32.mxu0 0.0
    %2328 = vmatmul.mubr.f32.gmra.mrb[0].mxu0 %v51
    %v2329 = vpop.f32.mrb[0].mxu0
    %v2330 = vadd.f32 0.0, %v2329
    %v2331 = vpop.f32.mrb[0].mxu0
    %2332 = vmatprep.mubr.f32.mxu0 0.0
    %2333 = vmatmul.mubr.f32.gmra.mrb[0].mxu0 %v54
    %v2334 = vpop.f32.mrb[0].mxu0
    %v2335 = vadd.f32 0.0, %v2334
    %v2336 = vpop.f32.mrb[0].mxu0
    %2337 = vdwg.mxu0
    %v2338 = vmax.f32 %v2300, 0.0
    %v2339 = vmax.f32 %v2305, 0.0
    %v2340 = vmax.f32 %v2310, 0.0
    %v2341 = vmax.f32 %v2315, 0.0
    %v2342 = vmax.f32 %v2320, 0.0
    %v2343 = vmax.f32 %v2325, 0.0
    %v2344 = vmax.f32 %v2330, 0.0
    %v2345 = vmax.f32 %v2335, 0.0
    %v2346 = vld [vmem:[%s0 + $0x8] sm:$0xff]
    %v2347 = vld [vmem:[%s0 + $0x18] sm:$0xff]
    %v2349 = vsel %vm299, %v2346, 0
    %2351 = vmatprep.subr.mxu0 0.0
    %2352 = vmatpush1.msra.mxu0 %v2338
    %2353 = vmatprep.subr.mxu0 0.0
    %2354 = vmatpush1.msra.mxu0 %v2339
    %2355 = vmatprep.subr.mxu0 0.0
    %2356 = vmatpush1.msra.mxu0 %v2340
    %2357 = vmatprep.subr.mxu0 0.0
    %2358 = vmatpush1.msra.mxu0 %v2341
    %2359 = vmatprep.subr.mxu0 0.0
    %2360 = vmatpush1.msra.mxu0 0.0
    %2361 = vmatprep.subr.mxu0 0.0
    %2362 = vmatpush1.msra.mxu0 0.0
    %2363 = vmatprep.subr.mxu0 0.0
    %2364 = vmatpush1.msra.mxu0 0.0
    %2365 = vmatprep.subr.mxu0 0.0
    %2366 = vmatpush1.msra.mxu0 0.0
    %2367 = vmatprep.subr.mxu0 0.0
    %2368 = vmatpush1.msra.mxu0 0.0
    %2369 = vmatprep.subr.mxu0 0.0
    %2370 = vmatpush1.msra.mxu0 0.0
    %2371 = vmatprep.subr.mxu0 0.0
    %2372 = vmatpush1.msra.mxu0 0.0
    %2373 = vmatprep.subr.mxu0 0.0
    %2374 = vmatpush1.msra.mxu0 0.0
    %2375 = vmatprep.subr.mxu0 0.0
    %2376 = vmatpush1.msra.mxu0 0.0
    %2377 = vmatprep.subr.mxu0 0.0
    %2378 = vmatpush1.msra.mxu0 0.0
    %2379 = vmatprep.subr.mxu0 0.0
    %2380 = vmatpush1.msra.mxu0 0.0
    %2381 = vmatprep.subr.mxu0 0.0
    %2382 = vmatpush1.msra.mxu0 0.0
    %2383 = vmatprep.subr.mxu0 0.0
    %2384 = vmatpush1.msra.mxu0 0.0
    %2385 = vmatprep.subr.mxu0 0.0
    %2386 = vmatpush1.msra.mxu0 0.0
    %2387 = vmatprep.subr.mxu0 0.0
    %2388 = vmatpush1.msra.mxu0 0.0
    %2389 = vmatprep.subr.mxu0 0.0
    %2390 = vmatpush1.msra.mxu0 0.0
    %2391 = vmatprep.subr.mxu0 0.0
    %2392 = vmatpush1.msra.mxu0 0.0
    %2393 = vmatprep.subr.mxu0 0.0
    %2394 = vmatpush1.msra.mxu0 0.0
    %2395 = vmatprep.subr.mxu0 0.0
    %2396 = vmatpush1.msra.mxu0 0.0
    %2397 = vmatprep.subr.mxu0 0.0
    %2398 = vmatpush1.msra.mxu0 0.0
    %2399 = vmatprep.subr.mxu0 0.0
    %2400 = vmatpush1.msra.mxu0 0.0
    %2401 = vmatprep.subr.mxu0 0.0
    %2402 = vmatpush1.msra.mxu0 0.0
    %2403 = vmatprep.subr.mxu0 0.0
    %2404 = vmatpush1.msra.mxu0 0.0
    %2405 = vmatprep.subr.mxu0 0.0
    %2406 = vmatpush1.msra.mxu0 0.0
    %2407 = vmatprep.subr.mxu0 0.0
    %2408 = vmatpush1.msra.mxu0 0.0
    %2409 = vmatprep.subr.mxu0 0.0
    %2410 = vmatpush1.msra.mxu0 0.0
    %2411 = vmatprep.subr.mxu0 0.0
    %2412 = vmatpush1.msra.mxu0 0.0
    %2413 = vmatprep.subr.mxu0 0.0
    %2414 = vmatpush1.msra.mxu0 0.0
    %2415 = vmatprep.mubr.f32.mxu0 0.0
    %2416 = vmatmul.mubr.f32.gmra.mrb[0].mxu0 %v2349
    %v2417 = vpop.f32.mrb[0].mxu0
    %v2418 = vadd.f32 0.0, %v2417
    %v2419 = vpop.f32.mrb[0].mxu0
    %2420 = vdwg.mxu0
    %v2422 = vsel %vm299, %v2347, 0
    %2424 = vmatprep.subr.mxu0 0.0
    %2425 = vmatpush1.msra.mxu0 %v2342
    %2426 = vmatprep.subr.mxu0 0.0
    %2427 = vmatpush1.msra.mxu0 %v2343
    %2428 = vmatprep.subr.mxu0 0.0
    %2429 = vmatpush1.msra.mxu0 %v2344
    %2430 = vmatprep.subr.mxu0 0.0
    %2431 = vmatpush1.msra.mxu0 %v2345
    %2432 = vmatprep.subr.mxu0 0.0
    %2433 = vmatpush1.msra.mxu0 0.0
    %2434 = vmatprep.subr.mxu0 0.0
    %2435 = vmatpush1.msra.mxu0 0.0
    %2436 = vmatprep.subr.mxu0 0.0
    %2437 = vmatpush1.msra.mxu0 0.0
    %2438 = vmatprep.subr.mxu0 0.0
    %2439 = vmatpush1.msra.mxu0 0.0
    %2440 = vmatprep.subr.mxu0 0.0
    %2441 = vmatpush1.msra.mxu0 0.0
    %2442 = vmatprep.subr.mxu0 0.0
    %2443 = vmatpush1.msra.mxu0 0.0
    %2444 = vmatprep.subr.mxu0 0.0
    %2445 = vmatpush1.msra.mxu0 0.0
    %2446 = vmatprep.subr.mxu0 0.0
    %2447 = vmatpush1.msra.mxu0 0.0
    %2448 = vmatprep.subr.mxu0 0.0
    %2449 = vmatpush1.msra.mxu0 0.0
    %2450 = vmatprep.subr.mxu0 0.0
    %2451 = vmatpush1.msra.mxu0 0.0
    %2452 = vmatprep.subr.mxu0 0.0
    %2453 = vmatpush1.msra.mxu0 0.0
    %2454 = vmatprep.subr.mxu0 0.0
    %2455 = vmatpush1.msra.mxu0 0.0
    %2456 = vmatprep.subr.mxu0 0.0
    %2457 = vmatpush1.msra.mxu0 0.0
    %2458 = vmatprep.subr.mxu0 0.0
    %2459 = vmatpush1.msra.mxu0 0.0
    %2460 = vmatprep.subr.mxu0 0.0
    %2461 = vmatpush1.msra.mxu0 0.0
    %2462 = vmatprep.subr.mxu0 0.0
    %2463 = vmatpush1.msra.mxu0 0.0
    %2464 = vmatprep.subr.mxu0 0.0
    %2465 = vmatpush1.msra.mxu0 0.0
    %2466 = vmatprep.subr.mxu0 0.0
    %2467 = vmatpush1.msra.mxu0 0.0
    %2468 = vmatprep.subr.mxu0 0.0
    %2469 = vmatpush1.msra.mxu0 0.0
    %2470 = vmatprep.subr.mxu0 0.0
    %2471 = vmatpush1.msra.mxu0 0.0
    %2472 = vmatprep.subr.mxu0 0.0
    %2473 = vmatpush1.msra.mxu0 0.0
    %2474 = vmatprep.subr.mxu0 0.0
    %2475 = vmatpush1.msra.mxu0 0.0
    %2476 = vmatprep.subr.mxu0 0.0
    %2477 = vmatpush1.msra.mxu0 0.0
    %2478 = vmatprep.subr.mxu0 0.0
    %2479 = vmatpush1.msra.mxu0 0.0
    %2480 = vmatprep.subr.mxu0 0.0
    %2481 = vmatpush1.msra.mxu0 0.0
    %2482 = vmatprep.subr.mxu0 0.0
    %2483 = vmatpush1.msra.mxu0 0.0
    %2484 = vmatprep.subr.mxu0 0.0
    %2485 = vmatpush1.msra.mxu0 0.0
    %2486 = vmatprep.subr.mxu0 0.0
    %2487 = vmatpush1.msra.mxu0 0.0
    %2488 = vmatprep.mubr.f32.mxu0 0.0
    %2489 = vmatmul.mubr.f32.gmra.mrb[0].mxu0 %v2422
    %v2490 = vpop.f32.mrb[0].mxu0
    %v2491 = vadd.f32 0.0, %v2490
    %v2492 = vpop.f32.mrb[0].mxu0
    %2493 = vdwg.mxu0
    %v2494 = vadd.f32 %v2222, %v2418
    %v2495 = vadd.f32 %v2223, %v2491
    %v2496 = vld [vmem:[%s3] sm:$0x1]
    %v2498 = vlaneseq
    %v2499 = vshrl.u32 %v2498, 7
    %v2500 = vsub.s32 0, %v2499
    %v2501 = vrot.slane %v2496, %v2500
    %v2503 = vadd.f32 %v2494, %v2501
    %v2504 = vadd.f32 %v2495, %v2501
    %vm2505 = vcmask 130048
    %2506 = vst.msk [vmem:[#allocation2] sm:$0xff] %vm2505, %v2503
    %2507 = vst.msk [vmem:[#allocation2 + $0x8] sm:$0xff] %vm2505, %v2504
    // Predicated region
    $region18: #{tpu_custom_call.1} parent=1 // pred_check
      _
    $region19: #{tpu_custom_call.1} parent=1 // pred_check_branch
      %2509 = sbr.rel (0) target = $region21
    $region20: #{tpu_custom_call.1} parent=1 // pred_region
      %s2511 = ssub.s32 256, 256
      %2512 = vsyncadd [#allocation3], %s2511
      %s2513 = sshll.u32 [#allocation2], 4
      %s2514 = int_to_ptr.vmem [resolvable:$true] %s2513
      %2519 = dma.vmem_to_hbm [thread:$0]  %s2514, 256, %s4, [#allocation3], 128, 128, 8
    $region21: #{tpu_custom_call.1} parent=1 // pred_fallthru
      _
    // Predicated region
    $region22: #{tpu_custom_call.1} parent=1 // pred_check
      _
    $region23: #{tpu_custom_call.1} parent=1 // pred_check_branch
      %2521 = sbr.rel (0) target = $region25
    $region24: #{tpu_custom_call.1} parent=1 // pred_region
      %2522 = dma.done [#allocation3], 256
    $region25: #{tpu_custom_call.1} parent=1 // pred_fallthru
      _
    %2523 = vsyncpa [#allocation3], 1

</llo_original>
